<compile_context>
chip_gen: v7x
topology: tpu7x:2x2x1
jax: 0.10.0
libtpu: 0.0.40
codegen_flags: <defaults>
</compile_context>

<pallas_src>
import functools

import jax
import jax.numpy as jnp
from jax.experimental import pallas as pl
from jax.experimental.pallas import tpu as pltpu

LANE = 128          # TPU lane width
TM = 128            # destination-row tile
TK = 128            # source-node (reduction) tile
_MASK_VAL = -1e30   # "minus infinity" for masked edges
_VMEM_LIMIT = 48 * 1024 * 1024  # safe on v5e/v6e (128 MiB) and v7x (64 MiB)


def _round_up(x, m):
    return ((x + m - 1) // m) * m


def _cparams(sem):
    return pltpu.CompilerParams(dimension_semantics=sem,
                                vmem_limit_bytes=_VMEM_LIMIT)


# ----------------------------------------------------------------------------
# Kernel 1: projection + fused attention-score matmul
#   feat  = h @ W            (N, H*Dp)
#   score = feat @ A         (N, Ep)   columns [el_0..el_{H-1}, er_0..er_{H-1}]
# ----------------------------------------------------------------------------
def _project_kernel(h_ref, w_ref, a_ref, feat_ref, sc_ref):
    x = h_ref[...].astype(jnp.bfloat16)
    feat = jnp.dot(x, w_ref[...], preferred_element_type=jnp.float32)
    feat_ref[...] = feat
    sc_ref[...] = jnp.dot(feat.astype(jnp.bfloat16), a_ref[...],
                          preferred_element_type=jnp.float32)


def pallas_project(h, w_bf16, a_bf16):
    n_pad, din_pad = h.shape
    hd_pad = w_bf16.shape[1]
    e_pad = a_bf16.shape[1]
    return pl.pallas_call(
        _project_kernel,
        out_shape=(jax.ShapeDtypeStruct((n_pad, hd_pad), jnp.float32),
                   jax.ShapeDtypeStruct((n_pad, e_pad), jnp.float32)),
        grid=(n_pad // TM,),
        in_specs=[
            pl.BlockSpec((TM, din_pad), lambda i: (i, 0)),
            pl.BlockSpec((din_pad, hd_pad), lambda i: (0, 0)),
            pl.BlockSpec((hd_pad, e_pad), lambda i: (0, 0)),
        ],
        out_specs=[
            pl.BlockSpec((TM, hd_pad), lambda i: (i, 0)),
            pl.BlockSpec((TM, e_pad), lambda i: (i, 0)),
        ],
        compiler_params=_cparams(("parallel",)),
    )(h, w_bf16, a_bf16)


# ----------------------------------------------------------------------------
# Kernel 2: per-head attention matrix (row-tiled softmax), bf16 output
# ----------------------------------------------------------------------------
def _attention_kernel(el_ref, er_ref, adj_ref, attn_ref, *, negative_slope):
    el = el_ref[0]                                   # (TM, 1)  dst-side term
    er = er_ref[0]                                   # (1, Np)  src-side term (pre-transposed)
    nbr = adj_ref[...].astype(jnp.float32) > 0.0     # (TM, Np)
    s = el + er
    # fused LeakyReLU + edge mask (two selects, no redundant post-exp multiply)
    s = jnp.where(nbr, jnp.where(s > 0.0, s, negative_slope * s), _MASK_VAL)
    m = jnp.max(s, axis=-1, keepdims=True)
    p = jnp.exp(s - m)                               # masked entries underflow to 0
    den = jnp.sum(p, axis=-1, keepdims=True)
    # rows with zero neighbors (incl. padded rows): force attn row to 0
    inv = jnp.where(m > 0.5 * _MASK_VAL,
                    pl.reciprocal(den, approx=True),
                    0.0)
    attn_ref[0] = (p * inv).astype(attn_ref.dtype)


def pallas_attention(el, er, adj, *, negative_slope):
    heads, n_pad, _ = el.shape
    kernel = functools.partial(_attention_kernel, negative_slope=negative_slope)
    return pl.pallas_call(
        kernel,
        out_shape=jax.ShapeDtypeStruct((heads, n_pad, n_pad), jnp.bfloat16),
        grid=(heads, n_pad // TM),
        in_specs=[
            pl.BlockSpec((1, TM, 1), lambda h, i: (h, i, 0)),
            pl.BlockSpec((1, 1, n_pad), lambda h, i: (h, 0, 0)),
            pl.BlockSpec((TM, n_pad), lambda h, i: (i, 0)),
        ],
        out_specs=pl.BlockSpec((1, TM, n_pad), lambda h, i: (h, i, 0)),
        compiler_params=_cparams(("parallel", "parallel")),
    )(el, er, adj)


# ----------------------------------------------------------------------------
# Kernel 3: one diffusion hop   fh <- alpha*f0 + (1-alpha) * attn @ fh
#   tiled matmul: grid=(heads, N/TM, N/TK), K axis 'arbitrary', f32 accumulator
# ----------------------------------------------------------------------------
def _hop_kernel(attn_ref, fh_ref, f0_ref, out_ref, acc_ref, *, alpha):
    @pl.when(pl.program_id(2) == 0)
    def _():
        acc_ref[...] = jnp.zeros_like(acc_ref)

    acc_ref[...] += jnp.dot(attn_ref[0], fh_ref[...].astype(jnp.bfloat16),
                            preferred_element_type=jnp.float32)

    @pl.when(pl.program_id(2) == pl.num_programs(2) - 1)
    def _():
        out_ref[...] = (alpha * f0_ref[...]
                        + (1.0 - alpha) * acc_ref[...]).astype(out_ref.dtype)


def pallas_hop(attn, fh, f0, *, alpha, d_pad):
    heads, n_pad, _ = attn.shape
    kernel = functools.partial(_hop_kernel, alpha=alpha)
    return pl.pallas_call(
        kernel,
        out_shape=jax.ShapeDtypeStruct(fh.shape, jnp.float32),
        grid=(heads, n_pad // TM, n_pad // TK),
        in_specs=[
            pl.BlockSpec((1, TM, TK), lambda h, i, k: (h, i, k)),
            pl.BlockSpec((TK, d_pad), lambda h, i, k: (k, h)),
            pl.BlockSpec((TM, d_pad), lambda h, i, k: (i, h)),
        ],
        out_specs=pl.BlockSpec((TM, d_pad), lambda h, i, k: (i, h)),
        scratch_shapes=[pltpu.VMEM((TM, d_pad), jnp.float32)],
        compiler_params=_cparams(("parallel", "parallel", "arbitrary")),
    )(attn, fh, f0)


# ----------------------------------------------------------------------------
# Kernel 4: average heads (lane-dense epilogue)
# ----------------------------------------------------------------------------
def _head_avg_kernel(x_ref, o_ref, *, heads, d_pad):
    x = x_ref[...]
    acc = x[:, 0:d_pad]
    for h in range(1, heads):                       # tiny, lane-aligned slices
        acc = acc + x[:, h * d_pad:(h + 1) * d_pad]
    o_ref[...] = (acc * (1.0 / heads)).astype(o_ref.dtype)


def pallas_head_average(x, *, heads, d_pad):
    n_pad, hd_pad = x.shape
    kernel = functools.partial(_head_avg_kernel, heads=heads, d_pad=d_pad)
    return pl.pallas_call(
        kernel,
        out_shape=jax.ShapeDtypeStruct((n_pad, d_pad), jnp.float32),
        grid=(n_pad // TM,),
        in_specs=[pl.BlockSpec((TM, hd_pad), lambda i: (i, 0))],
        out_specs=pl.BlockSpec((TM, d_pad), lambda i: (i, 0)),
        compiler_params=_cparams(("parallel",)),
    )(x)


# ----------------------------------------------------------------------------
# Kernel 5: bias-free linear (fc_rel), row-tiled, bf16 MXU inputs
# ----------------------------------------------------------------------------
def _linear_kernel(x_ref, w_ref, o_ref):
    o_ref[...] = jnp.dot(x_ref[...].astype(jnp.bfloat16), w_ref[...],
                         preferred_element_type=jnp.float32).astype(o_ref.dtype)


def pallas_linear(x, w_bf16):
    n_pad, fin_pad = x.shape
    fout_pad = w_bf16.shape[1]
    return pl.pallas_call(
        _linear_kernel,
        out_shape=jax.ShapeDtypeStruct((n_pad, fout_pad), jnp.float32),
        grid=(n_pad // TM,),
        in_specs=[pl.BlockSpec((TM, fin_pad), lambda i: (i, 0)),
                  pl.BlockSpec((fin_pad, fout_pad), lambda i: (0, 0))],
        out_specs=pl.BlockSpec((TM, fout_pad), lambda i: (i, 0)),
        compiler_params=_cparams(("parallel",)),
    )(x, w_bf16)


# ----------------------------------------------------------------------------
# Encoder: parameter setup + forward
# ----------------------------------------------------------------------------
def xavier_normal(key, shape, gain):
    fan_out, fan_in = shape[0], shape[1]
    std = gain * (2.0 / (fan_in + fan_out)) ** 0.5
    return std * jax.random.normal(key, shape, dtype=jnp.float32)


class WDGCNKGEncoderPallas:
    def __init__(self, key, *, num_layers, in_ent_dim, in_rel_dim, hidden_dim,
                 num_heads, hop_num, alpha, negative_slope):
        self.num_layers = num_layers
        self.hidden_dim = hidden_dim
        self.num_heads = num_heads
        self.hop_num = hop_num
        self.alpha = alpha
        self.negative_slope = negative_slope
        self.in_ent_dim = in_ent_dim
        self.in_rel_dim = in_rel_dim

        self.d_pad = _round_up(hidden_dim, LANE)        # per-head padded hidden
        self.e_pad = LANE                               # padded score columns
        assert 2 * num_heads <= self.e_pad

        keys = jax.random.split(key, 3 * num_layers + 1)
        gain = 1.414
        self.layer_params = []
        for l in range(num_layers):
            din = in_ent_dim if l == 0 else hidden_dim
            din_pad = _round_up(din, LANE) if l == 0 else self.d_pad
            w = xavier_normal(keys[3 * l], (num_heads * hidden_dim, din), gain).T
            a_l = xavier_normal(keys[3 * l + 1], (num_heads, hidden_dim), gain)
            a_r = xavier_normal(keys[3 * l + 2], (num_heads, hidden_dim), gain)

            w_full = jnp.zeros((din_pad, num_heads * self.d_pad), jnp.float32)
            a_full = jnp.zeros((num_heads * self.d_pad, self.e_pad), jnp.float32)
            for h in range(num_heads):
                w_full = w_full.at[:din, h * self.d_pad:h * self.d_pad + hidden_dim].set(
                    w[:, h * hidden_dim:(h + 1) * hidden_dim])
                a_full = a_full.at[h * self.d_pad:h * self.d_pad + hidden_dim, h].set(a_l[h])
                a_full = a_full.at[h * self.d_pad:h * self.d_pad + hidden_dim,
                                   num_heads + h].set(a_r[h])
            self.layer_params.append(
                (w_full.astype(jnp.bfloat16), a_full.astype(jnp.bfloat16), din_pad))

        # fc_rel: torch weight (hidden, in_rel) -> stored transposed and padded
        self.fin_rel_pad = _round_up(in_rel_dim, LANE)
        w_rel = xavier_normal(keys[-1], (hidden_dim, in_rel_dim), gain).T
        w_rel_full = jnp.zeros((self.fin_rel_pad, self.d_pad), jnp.float32)
        w_rel_full = w_rel_full.at[:in_rel_dim, :hidden_dim].set(w_rel)
        self.w_rel = w_rel_full.astype(jnp.bfloat16)

    def __call__(self, adj, entity_embedder, rel_embedder):
        n = entity_embedder.shape[0]
        n_pad = _round_up(n, TM)
        H = self.num_heads
        d_pad = self.d_pad

        # adjacency: bf16 (halves N^2 DMA vs f32); padded rows/cols are 0 (masked)
        adj_p = jnp.zeros((n_pad, n_pad), jnp.bfloat16)
        adj_p = adj_p.at[:n, :n].set(adj.astype(jnp.bfloat16))

        din0_pad = self.layer_params[0][2]
        h = jnp.zeros((n_pad, din0_pad), jnp.float32)
        h = h.at[:n, :self.in_ent_dim].set(entity_embedder.astype(jnp.float32))

        for l in range(self.num_layers):
            w_full, a_full, _ = self.layer_params[l]
            feat, scores = pallas_project(h, w_full, a_full)
            # el (dst) stays column-oriented; er (src) pre-transposed in the wrapper
            el = jnp.transpose(scores[:, :H]).reshape(H, n_pad, 1)
            er = jnp.transpose(scores[:, H:2 * H]).reshape(H, 1, n_pad)
            attn = pallas_attention(el, er, adj_p,
                                    negative_slope=self.negative_slope)
            fh = feat
            for _ in range(self.hop_num):
                fh = pallas_hop(attn, fh, feat, alpha=self.alpha, d_pad=d_pad)
            h = pallas_head_average(fh, heads=H, d_pad=d_pad)

        h_out = h[:n, :self.hidden_dim]

        r = rel_embedder.shape[0]
        r_pad = _round_up(r, TM)
        xr = jnp.zeros((r_pad, self.fin_rel_pad), jnp.float32)
        xr = xr.at[:r, :self.in_rel_dim].set(rel_embedder.astype(jnp.float32))
        hr = pallas_linear(xr, self.w_rel)[:r, :self.hidden_dim]
        return h_out, hr


# ----------------------------------------------------------------------------
if __name__ == "__main__":
    key = jax.random.PRNGKey(0)
    k_enc, k_ent, k_rel, k_adj = jax.random.split(key, 4)

    # small synthetic KG: 16 entities, 8 relations
    num_ents = 16
    num_rels = 8
    in_ent_dim = 32
    in_rel_dim = 16
    hidden_dim = 32

    encoder = WDGCNKGEncoderPallas(
        k_enc,
        num_layers=2, in_ent_dim=in_ent_dim, in_rel_dim=in_rel_dim,
        hidden_dim=hidden_dim, num_heads=2, hop_num=2,
        alpha=0.15, negative_slope=0.2,
    )

    entity_emb = jax.random.normal(k_ent, (num_ents, in_ent_dim), dtype=jnp.float32)
    rel_emb = jax.random.normal(k_rel, (num_rels, in_rel_dim), dtype=jnp.float32)

    # dense adjacency mask with self-loops (eval mode: no edge dropping)
    adj = (jax.random.uniform(k_adj, (num_ents, num_ents)) < 0.3).astype(jnp.float32)
    adj = jnp.maximum(adj, jnp.eye(num_ents, dtype=jnp.float32))

    fwd = jax.jit(lambda a, e, r: encoder(a, e, r))
    h_out, hr_out = fwd(adj, entity_emb, rel_emb)
    jax.block_until_ready((h_out, hr_out))

    assert h_out.shape == (num_ents, hidden_dim)
    assert hr_out.shape == (num_rels, hidden_dim)
    assert bool(jnp.all(jnp.isfinite(h_out))) and bool(jnp.all(jnp.isfinite(hr_out)))
    print("KERNEL_OK")
</pallas_src>

<mosaic_0001>
module attributes {stable_mosaic.version = 11 : i64} {
  func.func @_project_kernel(%arg0: i32, %arg1: memref<128x128xf32, #tpu.memory_space<vmem>>, %arg2: memref<128x256xbf16, #tpu.memory_space<vmem>>, %arg3: memref<256x128xbf16, #tpu.memory_space<vmem>>, %arg4: memref<128x256xf32, #tpu.memory_space<vmem>>, %arg5: memref<128x128xf32, #tpu.memory_space<vmem>>) attributes {dimension_semantics = [#tpu.dimension_semantics<parallel>], iteration_bounds = array<i64: 1>, scalar_prefetch = 0 : i64, scratch_operands = 0 : i64, tpu.core_type = #tpu.core_type<tc>, window_params = [{transform_indices = @transform_0, window_bounds = array<i64: 128, 128>}, {pipeline_mode = #tpu.pipeline_mode<synchronous>, transform_indices = @transform_1, window_bounds = array<i64: 128, 256>}, {pipeline_mode = #tpu.pipeline_mode<synchronous>, transform_indices = @transform_2, window_bounds = array<i64: 256, 128>}, {transform_indices = @transform_3, window_bounds = array<i64: 128, 256>}, {transform_indices = @transform_4, window_bounds = array<i64: 128, 128>}]} {
    %c0 = arith.constant 0 : index
    %c0_0 = arith.constant 0 : index
    %0 = vector.load %arg1[%c0, %c0_0] : memref<128x128xf32, #tpu.memory_space<vmem>>, vector<128x128xf32>
    %1 = arith.truncf %0 : vector<128x128xf32> to vector<128x128xbf16>
    %c0_1 = arith.constant 0 : index
    %c0_2 = arith.constant 0 : index
    %2 = vector.load %arg2[%c0_1, %c0_2] : memref<128x256xbf16, #tpu.memory_space<vmem>>, vector<128x256xbf16>
    %cst = arith.constant dense<0.000000e+00> : vector<128x256xf32>
    %3 = tpu.matmul %1, %2, %cst {dimension_numbers = #tpu.dot_dimension_numbers<[1], [0], [0], [1], [0, 0, 1, 1], [], []>} : vector<128x128xbf16>, vector<128x256xbf16>, vector<128x256xf32> -> vector<128x256xf32>
    %c0_3 = arith.constant 0 : index
    %c0_4 = arith.constant 0 : index
    %4 = vector.load %arg4[%c0_3, %c0_4] : memref<128x256xf32, #tpu.memory_space<vmem>>, vector<128x256xf32>
    tpu.vector_store %arg4[%c0_3, %c0_4], %3 {strides = array<i32>} : memref<128x256xf32, #tpu.memory_space<vmem>>, vector<128x256xf32>,
    %5 = arith.truncf %3 : vector<128x256xf32> to vector<128x256xbf16>
    %c0_5 = arith.constant 0 : index
    %c0_6 = arith.constant 0 : index
    %6 = vector.load %arg3[%c0_5, %c0_6] : memref<256x128xbf16, #tpu.memory_space<vmem>>, vector<256x128xbf16>
    %cst_7 = arith.constant dense<0.000000e+00> : vector<128x128xf32>
    %7 = tpu.matmul %5, %6, %cst_7 {dimension_numbers = #tpu.dot_dimension_numbers<[1], [0], [0], [1], [0, 0, 1, 1], [], []>} : vector<128x256xbf16>, vector<256x128xbf16>, vector<128x128xf32> -> vector<128x128xf32>
    %c0_8 = arith.constant 0 : index
    %c0_9 = arith.constant 0 : index
    %8 = vector.load %arg5[%c0_8, %c0_9] : memref<128x128xf32, #tpu.memory_space<vmem>>, vector<128x128xf32>
    tpu.vector_store %arg5[%c0_8, %c0_9], %7 {strides = array<i32>} : memref<128x128xf32, #tpu.memory_space<vmem>>, vector<128x128xf32>,
    return
  }
  func.func @transform_0(%arg0: i32) -> (i32, i32) {
    %c0_i32 = arith.constant 0 : i32
    %c0_i32_0 = arith.constant 0 : i32
    return %arg0, %c0_i32 : i32, i32
  }
  func.func @transform_1(%arg0: i32) -> (i32, i32) {
    %c0_i32 = arith.constant 0 : i32
    %c0_i32_0 = arith.constant 0 : i32
    %c0_i32_1 = arith.constant 0 : i32
    return %c0_i32, %c0_i32_0 : i32, i32
  }
  func.func @transform_2(%arg0: i32) -> (i32, i32) {
    %c0_i32 = arith.constant 0 : i32
    %c0_i32_0 = arith.constant 0 : i32
    %c0_i32_1 = arith.constant 0 : i32
    return %c0_i32, %c0_i32_0 : i32, i32
  }
  func.func @transform_3(%arg0: i32) -> (i32, i32) {
    %c0_i32 = arith.constant 0 : i32
    %c0_i32_0 = arith.constant 0 : i32
    return %arg0, %c0_i32 : i32, i32
  }
  func.func @transform_4(%arg0: i32) -> (i32, i32) {
    %c0_i32 = arith.constant 0 : i32
    %c0_i32_0 = arith.constant 0 : i32
    return %arg0, %c0_i32 : i32, i32
  }
}

module attributes {stable_mosaic.version = 11 : i64} {
  func.func @_attention_kernel(%arg0: i32, %arg1: i32, %arg2: memref<1x128x1xf32, #tpu.memory_space<vmem>>, %arg3: memref<1x1x128xf32, #tpu.memory_space<vmem>>, %arg4: memref<128x128xbf16, #tpu.memory_space<vmem>>, %arg5: memref<1x128x128xbf16, #tpu.memory_space<vmem>>) attributes {dimension_semantics = [#tpu.dimension_semantics<parallel>, #tpu.dimension_semantics<parallel>], iteration_bounds = array<i64: 2, 1>, scalar_prefetch = 0 : i64, scratch_operands = 0 : i64, tpu.core_type = #tpu.core_type<tc>, window_params = [{transform_indices = @transform_0, window_bounds = array<i64: 1, 128, 1>}, {transform_indices = @transform_1, window_bounds = array<i64: 1, 1, 128>}, {transform_indices = @transform_2, window_bounds = array<i64: 128, 128>}, {transform_indices = @transform_3, window_bounds = array<i64: 1, 128, 128>}]} {
    %c0 = arith.constant 0 : index
    %c0_0 = arith.constant 0 : index
    %c0_1 = arith.constant 0 : index
    %0 = vector.load %arg2[%c0, %c0_0, %c0_1] : memref<1x128x1xf32, #tpu.memory_space<vmem>>, vector<1x128x1xf32>
    %1 = vector.shape_cast %0 : vector<1x128x1xf32> to vector<128x1xf32>
    %c0_2 = arith.constant 0 : index
    %c0_3 = arith.constant 0 : index
    %c0_4 = arith.constant 0 : index
    %2 = vector.load %arg3[%c0_2, %c0_3, %c0_4] : memref<1x1x128xf32, #tpu.memory_space<vmem>>, vector<1x1x128xf32>
    %3 = vector.shape_cast %2 : vector<1x1x128xf32> to vector<1x128xf32>
    %c0_5 = arith.constant 0 : index
    %c0_6 = arith.constant 0 : index
    %4 = vector.load %arg4[%c0_5, %c0_6] : memref<128x128xbf16, #tpu.memory_space<vmem>>, vector<128x128xbf16>
    %5 = arith.extf %4 : vector<128x128xbf16> to vector<128x128xf32>
    %cst = arith.constant 0.000000e+00 : f32
    %6 = vector.broadcast %cst : f32 to vector<128x128xf32>
    %7 = arith.cmpf ogt, %5, %6 : vector<128x128xf32>
    %8 = vector.broadcast %1 : vector<128x1xf32> to vector<128x128xf32>
    %9 = vector.broadcast %3 : vector<1x128xf32> to vector<128x128xf32>
    %10 = arith.addf %8, %9 : vector<128x128xf32>
    %cst_7 = arith.constant 0.000000e+00 : f32
    %11 = vector.broadcast %cst_7 : f32 to vector<128x128xf32>
    %12 = arith.cmpf ogt, %10, %11 : vector<128x128xf32>
    %cst_8 = arith.constant 2.000000e-01 : f32
    %13 = vector.broadcast %cst_8 : f32 to vector<128x128xf32>
    %14 = arith.mulf %13, %10 : vector<128x128xf32>
    %15 = arith.select %12, %10, %14 : vector<128x128xi1>, vector<128x128xf32>
    %cst_9 = arith.constant -1.000000e+30 : f32
    %16 = vector.broadcast %cst_9 : f32 to vector<128x128xf32>
    %17 = arith.select %7, %15, %16 : vector<128x128xi1>, vector<128x128xf32>
    %cst_10 = arith.constant dense<0xFF800000> : vector<128xf32>
    %18 = vector.multi_reduction <maximumf>, %17, %cst_10 [1] : vector<128x128xf32> to vector<128xf32>
    %19 = vector.shape_cast %18 : vector<128xf32> to vector<128x1xf32>
    %20 = vector.broadcast %19 : vector<128x1xf32> to vector<128x128xf32>
    %21 = arith.subf %17, %20 : vector<128x128xf32>
    %22 = math.exp %21 : vector<128x128xf32>
    %cst_11 = arith.constant dense<0.000000e+00> : vector<128xf32>
    %23 = vector.multi_reduction <add>, %22, %cst_11 [1] : vector<128x128xf32> to vector<128xf32>
    %24 = vector.shape_cast %23 : vector<128xf32> to vector<128x1xf32>
    %cst_12 = arith.constant -5.000000e+29 : f32
    %25 = vector.broadcast %cst_12 : f32 to vector<128x1xf32>
    %26 = arith.cmpf ogt, %19, %25 : vector<128x1xf32>
    %27 = tpu.reciprocal %24 {approx = true} : vector<128x1xf32> -> vector<128x1xf32>
    %cst_13 = arith.constant 0.000000e+00 : f32
    %28 = vector.broadcast %cst_13 : f32 to vector<128x1xf32>
    %29 = arith.select %26, %27, %28 : vector<128x1xi1>, vector<128x1xf32>
    %30 = vector.broadcast %29 : vector<128x1xf32> to vector<128x128xf32>
    %31 = arith.mulf %22, %30 : vector<128x128xf32>
    %32 = arith.truncf %31 : vector<128x128xf32> to vector<128x128xbf16>
    %c0_14 = arith.constant 0 : index
    %c0_15 = arith.constant 0 : index
    %c0_16 = arith.constant 0 : index
    %33 = vector.load %arg5[%c0_14, %c0_15, %c0_16] : memref<1x128x128xbf16, #tpu.memory_space<vmem>>, vector<1x128x128xbf16>
    %34 = vector.shape_cast %33 : vector<1x128x128xbf16> to vector<128x128xbf16>
    %35 = vector.shape_cast %32 : vector<128x128xbf16> to vector<1x128x128xbf16>
    tpu.vector_store %arg5[%c0_14, %c0_15, %c0_16], %35 {strides = array<i32>} : memref<1x128x128xbf16, #tpu.memory_space<vmem>>, vector<1x128x128xbf16>,
    return
  }
  func.func @transform_0(%arg0: i32, %arg1: i32) -> (i32, i32, i32) {
    %c0_i32 = arith.constant 0 : i32
    %c0_i32_0 = arith.constant 0 : i32
    return %arg0, %arg1, %c0_i32 : i32, i32, i32
  }
  func.func @transform_1(%arg0: i32, %arg1: i32) -> (i32, i32, i32) {
    %c0_i32 = arith.constant 0 : i32
    %c0_i32_0 = arith.constant 0 : i32
    %c0_i32_1 = arith.constant 0 : i32
    return %arg0, %c0_i32, %c0_i32_0 : i32, i32, i32
  }
  func.func @transform_2(%arg0: i32, %arg1: i32) -> (i32, i32) {
    %c0_i32 = arith.constant 0 : i32
    %c0_i32_0 = arith.constant 0 : i32
    return %arg1, %c0_i32 : i32, i32
  }
  func.func @transform_3(%arg0: i32, %arg1: i32) -> (i32, i32, i32) {
    %c0_i32 = arith.constant 0 : i32
    %c0_i32_0 = arith.constant 0 : i32
    return %arg0, %arg1, %c0_i32 : i32, i32, i32
  }
}

module attributes {stable_mosaic.version = 11 : i64} {
  func.func @_hop_kernel(%arg0: i32, %arg1: i32, %arg2: i32, %arg3: memref<1x128x128xbf16, #tpu.memory_space<vmem>>, %arg4: memref<128x128xf32, #tpu.memory_space<vmem>>, %arg5: memref<128x128xf32, #tpu.memory_space<vmem>>, %arg6: memref<128x128xf32, #tpu.memory_space<vmem>>, %arg7: memref<128x128xf32, #tpu.memory_space<vmem>>) attributes {dimension_semantics = [#tpu.dimension_semantics<parallel>, #tpu.dimension_semantics<parallel>, #tpu.dimension_semantics<arbitrary>], iteration_bounds = array<i64: 2, 1, 1>, scalar_prefetch = 0 : i64, scratch_operands = 1 : i64, tpu.core_type = #tpu.core_type<tc>, window_params = [{transform_indices = @transform_0, window_bounds = array<i64: 1, 128, 128>}, {transform_indices = @transform_1, window_bounds = array<i64: 128, 128>}, {transform_indices = @transform_2, window_bounds = array<i64: 128, 128>}, {transform_indices = @transform_3, window_bounds = array<i64: 128, 128>}]} {
    %c0_i32 = arith.constant 0 : i32
    %0 = arith.cmpi eq, %arg2, %c0_i32 : i32
    %1 = arith.extui %0 : i1 to i32
    %c0_i32_0 = arith.constant 0 : i32
    %2 = arith.cmpi ne, %1, %c0_i32_0 : i32
    scf.if %2 {
      %cst_11 = arith.constant 0.000000e+00 : f32
      %14 = vector.broadcast %cst_11 : f32 to vector<128x128xf32>
      %c0_12 = arith.constant 0 : index
      %c0_13 = arith.constant 0 : index
      %15 = vector.load %arg7[%c0_12, %c0_13] : memref<128x128xf32, #tpu.memory_space<vmem>>, vector<128x128xf32>
      tpu.vector_store %arg7[%c0_12, %c0_13], %14 {strides = array<i32>} : memref<128x128xf32, #tpu.memory_space<vmem>>, vector<128x128xf32>,
    } else {
    }
    %c0 = arith.constant 0 : index
    %c0_1 = arith.constant 0 : index
    %3 = vector.load %arg7[%c0, %c0_1] : memref<128x128xf32, #tpu.memory_space<vmem>>, vector<128x128xf32>
    %c0_2 = arith.constant 0 : index
    %c0_3 = arith.constant 0 : index
    %c0_4 = arith.constant 0 : index
    %4 = vector.load %arg3[%c0_2, %c0_3, %c0_4] : memref<1x128x128xbf16, #tpu.memory_space<vmem>>, vector<1x128x128xbf16>
    %5 = vector.shape_cast %4 : vector<1x128x128xbf16> to vector<128x128xbf16>
    %c0_5 = arith.constant 0 : index
    %c0_6 = arith.constant 0 : index
    %6 = vector.load %arg4[%c0_5, %c0_6] : memref<128x128xf32, #tpu.memory_space<vmem>>, vector<128x128xf32>
    %7 = arith.truncf %6 : vector<128x128xf32> to vector<128x128xbf16>
    %cst = arith.constant dense<0.000000e+00> : vector<128x128xf32>
    %8 = tpu.matmul %5, %7, %cst {dimension_numbers = #tpu.dot_dimension_numbers<[1], [0], [0], [1], [0, 0, 1, 1], [], []>} : vector<128x128xbf16>, vector<128x128xbf16>, vector<128x128xf32> -> vector<128x128xf32>
    %9 = arith.addf %3, %8 : vector<128x128xf32>
    %c0_7 = arith.constant 0 : index
    %c0_8 = arith.constant 0 : index
    %10 = vector.load %arg7[%c0_7, %c0_8] : memref<128x128xf32, #tpu.memory_space<vmem>>, vector<128x128xf32>
    tpu.vector_store %arg7[%c0_7, %c0_8], %9 {strides = array<i32>} : memref<128x128xf32, #tpu.memory_space<vmem>>, vector<128x128xf32>,
    %c0_i32_9 = arith.constant 0 : i32
    %11 = arith.cmpi eq, %arg2, %c0_i32_9 : i32
    %12 = arith.extui %11 : i1 to i32
    %c0_i32_10 = arith.constant 0 : i32
    %13 = arith.cmpi ne, %12, %c0_i32_10 : i32
    scf.if %13 {
      %c0_11 = arith.constant 0 : index
      %c0_12 = arith.constant 0 : index
      %14 = vector.load %arg5[%c0_11, %c0_12] : memref<128x128xf32, #tpu.memory_space<vmem>>, vector<128x128xf32>
      %cst_13 = arith.constant 1.500000e-01 : f32
      %15 = vector.broadcast %cst_13 : f32 to vector<128x128xf32>
      %16 = arith.mulf %15, %14 : vector<128x128xf32>
      %c0_14 = arith.constant 0 : index
      %c0_15 = arith.constant 0 : index
      %17 = vector.load %arg7[%c0_14, %c0_15] : memref<128x128xf32, #tpu.memory_space<vmem>>, vector<128x128xf32>
      %cst_16 = arith.constant 8.500000e-01 : f32
      %18 = vector.broadcast %cst_16 : f32 to vector<128x128xf32>
      %19 = arith.mulf %18, %17 : vector<128x128xf32>
      %20 = arith.addf %16, %19 : vector<128x128xf32>
      %c0_17 = arith.constant 0 : index
      %c0_18 = arith.constant 0 : index
      %21 = vector.load %arg6[%c0_17, %c0_18] : memref<128x128xf32, #tpu.memory_space<vmem>>, vector<128x128xf32>
      tpu.vector_store %arg6[%c0_17, %c0_18], %20 {strides = array<i32>} : memref<128x128xf32, #tpu.memory_space<vmem>>, vector<128x128xf32>,
    } else {
    }
    return
  }
  func.func @transform_0(%arg0: i32, %arg1: i32, %arg2: i32) -> (i32, i32, i32) {
    %c0_i32 = arith.constant 0 : i32
    return %arg0, %arg1, %arg2 : i32, i32, i32
  }
  func.func @transform_1(%arg0: i32, %arg1: i32, %arg2: i32) -> (i32, i32) {
    %c0_i32 = arith.constant 0 : i32
    return %arg2, %arg0 : i32, i32
  }
  func.func @transform_2(%arg0: i32, %arg1: i32, %arg2: i32) -> (i32, i32) {
    %c0_i32 = arith.constant 0 : i32
    return %arg1, %arg0 : i32, i32
  }
  func.func @transform_3(%arg0: i32, %arg1: i32, %arg2: i32) -> (i32, i32) {
    %c0_i32 = arith.constant 0 : i32
    return %arg1, %arg0 : i32, i32
  }
}

module attributes {stable_mosaic.version = 11 : i64} {
  func.func @_head_avg_kernel(%arg0: i32, %arg1: memref<128x256xf32, #tpu.memory_space<vmem>>, %arg2: memref<128x128xf32, #tpu.memory_space<vmem>>) attributes {dimension_semantics = [#tpu.dimension_semantics<parallel>], iteration_bounds = array<i64: 1>, scalar_prefetch = 0 : i64, scratch_operands = 0 : i64, tpu.core_type = #tpu.core_type<tc>, window_params = [{transform_indices = @transform_0, window_bounds = array<i64: 128, 256>}, {transform_indices = @transform_1, window_bounds = array<i64: 128, 128>}]} {
    %c0 = arith.constant 0 : index
    %c0_0 = arith.constant 0 : index
    %0 = vector.load %arg1[%c0, %c0_0] : memref<128x256xf32, #tpu.memory_space<vmem>>, vector<128x256xf32>
    %1 = vector.extract_strided_slice %0 {offsets = [0, 0], sizes = [128, 128], strides = [1, 1]} : vector<128x256xf32> to vector<128x128xf32>
    %2 = vector.extract_strided_slice %0 {offsets = [0, 128], sizes = [128, 128], strides = [1, 1]} : vector<128x256xf32> to vector<128x128xf32>
    %3 = arith.addf %1, %2 : vector<128x128xf32>
    %cst = arith.constant 5.000000e-01 : f32
    %4 = vector.broadcast %cst : f32 to vector<128x128xf32>
    %5 = arith.mulf %3, %4 : vector<128x128xf32>
    %c0_1 = arith.constant 0 : index
    %c0_2 = arith.constant 0 : index
    %6 = vector.load %arg2[%c0_1, %c0_2] : memref<128x128xf32, #tpu.memory_space<vmem>>, vector<128x128xf32>
    tpu.vector_store %arg2[%c0_1, %c0_2], %5 {strides = array<i32>} : memref<128x128xf32, #tpu.memory_space<vmem>>, vector<128x128xf32>,
    return
  }
  func.func @transform_0(%arg0: i32) -> (i32, i32) {
    %c0_i32 = arith.constant 0 : i32
    %c0_i32_0 = arith.constant 0 : i32
    return %arg0, %c0_i32 : i32, i32
  }
  func.func @transform_1(%arg0: i32) -> (i32, i32) {
    %c0_i32 = arith.constant 0 : i32
    %c0_i32_0 = arith.constant 0 : i32
    return %arg0, %c0_i32 : i32, i32
  }
}

module attributes {stable_mosaic.version = 11 : i64} {
  func.func @_linear_kernel(%arg0: i32, %arg1: memref<128x128xf32, #tpu.memory_space<vmem>>, %arg2: memref<128x128xbf16, #tpu.memory_space<vmem>>, %arg3: memref<128x128xf32, #tpu.memory_space<vmem>>) attributes {dimension_semantics = [#tpu.dimension_semantics<parallel>], iteration_bounds = array<i64: 1>, scalar_prefetch = 0 : i64, scratch_operands = 0 : i64, tpu.core_type = #tpu.core_type<tc>, window_params = [{transform_indices = @transform_0, window_bounds = array<i64: 128, 128>}, {pipeline_mode = #tpu.pipeline_mode<synchronous>, transform_indices = @transform_1, window_bounds = array<i64: 128, 128>}, {transform_indices = @transform_2, window_bounds = array<i64: 128, 128>}]} {
    %c0 = arith.constant 0 : index
    %c0_0 = arith.constant 0 : index
    %0 = vector.load %arg1[%c0, %c0_0] : memref<128x128xf32, #tpu.memory_space<vmem>>, vector<128x128xf32>
    %1 = arith.truncf %0 : vector<128x128xf32> to vector<128x128xbf16>
    %c0_1 = arith.constant 0 : index
    %c0_2 = arith.constant 0 : index
    %2 = vector.load %arg2[%c0_1, %c0_2] : memref<128x128xbf16, #tpu.memory_space<vmem>>, vector<128x128xbf16>
    %cst = arith.constant dense<0.000000e+00> : vector<128x128xf32>
    %3 = tpu.matmul %1, %2, %cst {dimension_numbers = #tpu.dot_dimension_numbers<[1], [0], [0], [1], [0, 0, 1, 1], [], []>} : vector<128x128xbf16>, vector<128x128xbf16>, vector<128x128xf32> -> vector<128x128xf32>
    %c0_3 = arith.constant 0 : index
    %c0_4 = arith.constant 0 : index
    %4 = vector.load %arg3[%c0_3, %c0_4] : memref<128x128xf32, #tpu.memory_space<vmem>>, vector<128x128xf32>
    tpu.vector_store %arg3[%c0_3, %c0_4], %3 {strides = array<i32>} : memref<128x128xf32, #tpu.memory_space<vmem>>, vector<128x128xf32>,
    return
  }
  func.func @transform_0(%arg0: i32) -> (i32, i32) {
    %c0_i32 = arith.constant 0 : i32
    %c0_i32_0 = arith.constant 0 : i32
    return %arg0, %c0_i32 : i32, i32
  }
  func.func @transform_1(%arg0: i32) -> (i32, i32) {
    %c0_i32 = arith.constant 0 : i32
    %c0_i32_0 = arith.constant 0 : i32
    %c0_i32_1 = arith.constant 0 : i32
    return %c0_i32, %c0_i32_0 : i32, i32
  }
  func.func @transform_2(%arg0: i32) -> (i32, i32) {
    %c0_i32 = arith.constant 0 : i32
    %c0_i32_0 = arith.constant 0 : i32
    return %arg0, %c0_i32 : i32, i32
  }
}

</mosaic_0001>

<llo_original>
// kernel: _lambda_.11
$region0: #{_lambda_.11}
  #allocation0 [shape = 'u32[]', space=smem, size = 0x4, offset = 0x4, fixed_abs, tag = 'smem constant byte address 0x4 - core index']
  #allocation1 [shape = 'u32[144,128]{1,0:T(1,128)}', space=vmem, size = 0x12000, scoped, tag = 'internal scratch']
  %s0 = inlined_call_operand.vmem [shape: f32[128,128], index: 0, kind: input, shape index: {}]
  %s1 = inlined_call_operand.vmem [shape: bf16[128,256], index: 1, kind: input, shape index: {}]
  %s2 = inlined_call_operand.vmem [shape: bf16[256,128], index: 2, kind: input, shape index: {}]
  %s3 = inlined_call_operand.vmem [shape: f32[128,256], index: 3, kind: output, shape index: {0}]
  %s4 = inlined_call_operand.vmem [shape: f32[128,128], index: 4, kind: output, shape index: {1}]
  %5 = xla_tuple %s3, %s4
  %s6 = sld [smem:[#allocation0]]
  $region30: #{_lambda_.11} parent=0
    _
  %s8 = ssub.s32 1, %s6
  %s9 = scalar_select 0, %s8, %s6
  // Predicated region
  $region2: #{_lambda_.11} parent=0 // pred_check
    _
  $region3: #{_lambda_.11} parent=0 // pred_check_branch
    %11 = sbr.rel (0) target = $region5
  $region4: #{_lambda_.11} parent=0 // pred_region
    _
  $region5: #{_lambda_.11} parent=0 // pred_fallthru
    _
  // Predicated region
  $region6: #{_lambda_.11} parent=0 // pred_check
    _
  $region7: #{_lambda_.11} parent=0 // pred_check_branch
    %13 = sbr.rel (0) target = $region9
  $region8: #{_lambda_.11} parent=0 // pred_region
    _
  $region9: #{_lambda_.11} parent=0 // pred_fallthru
    _
  // Predicated region
  $region10: #{_lambda_.11} parent=0 // pred_check
    _
  $region11: #{_lambda_.11} parent=0 // pred_check_branch
    %15 = sbr.rel (0) target = $region13
  $region12: #{_lambda_.11} parent=0 // pred_region
    _
  $region13: #{_lambda_.11} parent=0 // pred_fallthru
    _
  %v17 = vld [vmem:[%s0] sm:$0xff]
  %v18 = vld [vmem:[%s0 + $0x8] sm:$0xff]
  %v19 = vld [vmem:[%s0 + $0x10] sm:$0xff]
  %v20 = vld [vmem:[%s0 + $0x18] sm:$0xff]
  %v21 = vld [vmem:[%s0 + $0x20] sm:$0xff]
  %v22 = vld [vmem:[%s0 + $0x28] sm:$0xff]
  %v23 = vld [vmem:[%s0 + $0x30] sm:$0xff]
  %v24 = vld [vmem:[%s0 + $0x38] sm:$0xff]
  %v25 = vld [vmem:[%s0 + $0x40] sm:$0xff]
  %v26 = vld [vmem:[%s0 + $0x48] sm:$0xff]
  %v27 = vld [vmem:[%s0 + $0x50] sm:$0xff]
  %v28 = vld [vmem:[%s0 + $0x58] sm:$0xff]
  %v29 = vld [vmem:[%s0 + $0x60] sm:$0xff]
  %v30 = vld [vmem:[%s0 + $0x68] sm:$0xff]
  %v31 = vld [vmem:[%s0 + $0x70] sm:$0xff]
  %v32 = vld [vmem:[%s0 + $0x78] sm:$0xff]
  %v33 = vpack.c.bf16 %v18, %v17
  %v34 = vpack.c.bf16 %v20, %v19
  %v35 = vpack.c.bf16 %v22, %v21
  %v36 = vpack.c.bf16 %v24, %v23
  %v37 = vpack.c.bf16 %v26, %v25
  %v38 = vpack.c.bf16 %v28, %v27
  %v39 = vpack.c.bf16 %v30, %v29
  %v40 = vpack.c.bf16 %v32, %v31
  %v41 = vld [vmem:[%s1] sm:$0xff]
  %v42 = vld [vmem:[%s1 + $0x8] sm:$0xff]
  %v43 = vld [vmem:[%s1 + $0x10] sm:$0xff]
  %v44 = vld [vmem:[%s1 + $0x18] sm:$0xff]
  %v45 = vld [vmem:[%s1 + $0x20] sm:$0xff]
  %v46 = vld [vmem:[%s1 + $0x28] sm:$0xff]
  %v47 = vld [vmem:[%s1 + $0x30] sm:$0xff]
  %v48 = vld [vmem:[%s1 + $0x38] sm:$0xff]
  %v49 = vld [vmem:[%s1 + $0x40] sm:$0xff]
  %v50 = vld [vmem:[%s1 + $0x48] sm:$0xff]
  %v51 = vld [vmem:[%s1 + $0x50] sm:$0xff]
  %v52 = vld [vmem:[%s1 + $0x58] sm:$0xff]
  %v53 = vld [vmem:[%s1 + $0x60] sm:$0xff]
  %v54 = vld [vmem:[%s1 + $0x68] sm:$0xff]
  %v55 = vld [vmem:[%s1 + $0x70] sm:$0xff]
  %v56 = vld [vmem:[%s1 + $0x78] sm:$0xff]
  %v73 = vunpack.c.l.b16 %v41
  %v74 = vunpack.c.h.b16 %v41
  %v75 = vunpack.c.l.b16 %v42
  %v76 = vunpack.c.h.b16 %v42
  %v77 = vunpack.c.l.b16 %v43
  %v78 = vunpack.c.h.b16 %v43
  %v79 = vunpack.c.l.b16 %v44
  %v80 = vunpack.c.h.b16 %v44
  %v81 = vunpack.c.l.b16 %v45
  %v82 = vunpack.c.h.b16 %v45
  %v83 = vunpack.c.l.b16 %v46
  %v84 = vunpack.c.h.b16 %v46
  %v85 = vunpack.c.l.b16 %v47
  %v86 = vunpack.c.h.b16 %v47
  %v87 = vunpack.c.l.b16 %v48
  %v88 = vunpack.c.h.b16 %v48
  %v89 = vunpack.c.l.b16 %v49
  %v90 = vunpack.c.h.b16 %v49
  %v91 = vunpack.c.l.b16 %v50
  %v92 = vunpack.c.h.b16 %v50
  %v93 = vunpack.c.l.b16 %v51
  %v94 = vunpack.c.h.b16 %v51
  %v95 = vunpack.c.l.b16 %v52
  %v96 = vunpack.c.h.b16 %v52
  %v97 = vunpack.c.l.b16 %v53
  %v98 = vunpack.c.h.b16 %v53
  %v99 = vunpack.c.l.b16 %v54
  %v100 = vunpack.c.h.b16 %v54
  %v101 = vunpack.c.l.b16 %v55
  %v102 = vunpack.c.h.b16 %v55
  %v103 = vunpack.c.l.b16 %v56
  %v104 = vunpack.c.h.b16 %v56
  %v105 = vpack.c.b16 %v75, %v73
  %v106 = vpack.c.b16 %v76, %v74
  %v107 = vpack.c.b16 %v79, %v77
  %v108 = vpack.c.b16 %v80, %v78
  %v109 = vpack.c.b16 %v83, %v81
  %v110 = vpack.c.b16 %v84, %v82
  %v111 = vpack.c.b16 %v87, %v85
  %v112 = vpack.c.b16 %v88, %v86
  %v113 = vpack.c.b16 %v91, %v89
  %v114 = vpack.c.b16 %v92, %v90
  %v115 = vpack.c.b16 %v95, %v93
  %v116 = vpack.c.b16 %v96, %v94
  %v117 = vpack.c.b16 %v99, %v97
  %v118 = vpack.c.b16 %v100, %v98
  %v119 = vpack.c.b16 %v103, %v101
  %v120 = vpack.c.b16 %v104, %v102
  %137 = vmatprep.subr.bf16.mxu0 %v106
  %138 = vmatpush1.bf16.msra.mxu0 %v105
  %139 = vmatprep.subr.bf16.mxu0 %v108
  %140 = vmatpush1.bf16.msra.mxu0 %v107
  %141 = vmatprep.subr.bf16.mxu0 %v110
  %142 = vmatpush1.bf16.msra.mxu0 %v109
  %143 = vmatprep.subr.bf16.mxu0 %v112
  %144 = vmatpush1.bf16.msra.mxu0 %v111
  %145 = vmatprep.subr.bf16.mxu0 %v114
  %146 = vmatpush1.bf16.msra.mxu0 %v113
  %147 = vmatprep.subr.bf16.mxu0 %v116
  %148 = vmatpush1.bf16.msra.mxu0 %v115
  %149 = vmatprep.subr.bf16.mxu0 %v118
  %150 = vmatpush1.bf16.msra.mxu0 %v117
  %151 = vmatprep.subr.bf16.mxu0 %v120
  %152 = vmatpush1.bf16.msra.mxu0 %v119
  %153 = vmatprep.subr.bf16.mxu0 0
  %154 = vmatpush1.bf16.msra.mxu0 0
  %155 = vmatprep.subr.bf16.mxu0 0
  %156 = vmatpush1.bf16.msra.mxu0 0
  %157 = vmatprep.subr.bf16.mxu0 0
  %158 = vmatpush1.bf16.msra.mxu0 0
  %159 = vmatprep.subr.bf16.mxu0 0
  %160 = vmatpush1.bf16.msra.mxu0 0
  %161 = vmatprep.subr.bf16.mxu0 0
  %162 = vmatpush1.bf16.msra.mxu0 0
  %163 = vmatprep.subr.bf16.mxu0 0
  %164 = vmatpush1.bf16.msra.mxu0 0
  %165 = vmatprep.subr.bf16.mxu0 0
  %166 = vmatpush1.bf16.msra.mxu0 0
  %167 = vmatprep.subr.bf16.mxu0 0
  %168 = vmatpush1.bf16.msra.mxu0 0
  %169 = vmatprep.mubr.bf16.mxu0 0
  %170 = vmatmul.mubr.bf16.gmra.mrb[0].mxu0 %v33
  %v171 = vpop.f32.mrb[0].mxu0
  %v172 = vadd.f32 0.0, %v171
  %v173 = vpop.f32.mrb[0].mxu0
  %v174 = vadd.f32 0.0, %v173
  %v175 = vpop.f32.mrb[0].mxu0
  %v176 = vadd.f32 0.0, %v175
  %v177 = vpop.f32.mrb[0].mxu0
  %v178 = vadd.f32 0.0, %v177
  %179 = vmatprep.mubr.bf16.mxu0 0
  %180 = vmatmul.mubr.bf16.gmra.mrb[0].mxu0 %v34
  %v181 = vpop.f32.mrb[0].mxu0
  %v182 = vadd.f32 0.0, %v181
  %v183 = vpop.f32.mrb[0].mxu0
  %v184 = vadd.f32 0.0, %v183
  %v185 = vpop.f32.mrb[0].mxu0
  %v186 = vadd.f32 0.0, %v185
  %v187 = vpop.f32.mrb[0].mxu0
  %v188 = vadd.f32 0.0, %v187
  %189 = vmatprep.mubr.bf16.mxu0 0
  %190 = vmatmul.mubr.bf16.gmra.mrb[0].mxu0 %v35
  %v191 = vpop.f32.mrb[0].mxu0
  %v192 = vadd.f32 0.0, %v191
  %v193 = vpop.f32.mrb[0].mxu0
  %v194 = vadd.f32 0.0, %v193
  %v195 = vpop.f32.mrb[0].mxu0
  %v196 = vadd.f32 0.0, %v195
  %v197 = vpop.f32.mrb[0].mxu0
  %v198 = vadd.f32 0.0, %v197
  %199 = vmatprep.mubr.bf16.mxu0 0
  %200 = vmatmul.mubr.bf16.gmra.mrb[0].mxu0 %v36
  %v201 = vpop.f32.mrb[0].mxu0
  %v202 = vadd.f32 0.0, %v201
  %v203 = vpop.f32.mrb[0].mxu0
  %v204 = vadd.f32 0.0, %v203
  %v205 = vpop.f32.mrb[0].mxu0
  %v206 = vadd.f32 0.0, %v205
  %v207 = vpop.f32.mrb[0].mxu0
  %v208 = vadd.f32 0.0, %v207
  %209 = vmatprep.mubr.bf16.mxu0 0
  %210 = vmatmul.mubr.bf16.gmra.mrb[0].mxu0 %v37
  %v211 = vpop.f32.mrb[0].mxu0
  %v212 = vadd.f32 0.0, %v211
  %v213 = vpop.f32.mrb[0].mxu0
  %v214 = vadd.f32 0.0, %v213
  %v215 = vpop.f32.mrb[0].mxu0
  %v216 = vadd.f32 0.0, %v215
  %v217 = vpop.f32.mrb[0].mxu0
  %v218 = vadd.f32 0.0, %v217
  %219 = vmatprep.mubr.bf16.mxu0 0
  %220 = vmatmul.mubr.bf16.gmra.mrb[0].mxu0 %v38
  %v221 = vpop.f32.mrb[0].mxu0
  %v222 = vadd.f32 0.0, %v221
  %v223 = vpop.f32.mrb[0].mxu0
  %v224 = vadd.f32 0.0, %v223
  %v225 = vpop.f32.mrb[0].mxu0
  %v226 = vadd.f32 0.0, %v225
  %v227 = vpop.f32.mrb[0].mxu0
  %v228 = vadd.f32 0.0, %v227
  %229 = vmatprep.mubr.bf16.mxu0 0
  %230 = vmatmul.mubr.bf16.gmra.mrb[0].mxu0 %v39
  %v231 = vpop.f32.mrb[0].mxu0
  %v232 = vadd.f32 0.0, %v231
  %v233 = vpop.f32.mrb[0].mxu0
  %v234 = vadd.f32 0.0, %v233
  %v235 = vpop.f32.mrb[0].mxu0
  %v236 = vadd.f32 0.0, %v235
  %v237 = vpop.f32.mrb[0].mxu0
  %v238 = vadd.f32 0.0, %v237
  %239 = vmatprep.mubr.bf16.mxu0 0
  %240 = vmatmul.mubr.bf16.gmra.mrb[0].mxu0 %v40
  %v241 = vpop.f32.mrb[0].mxu0
  %v242 = vadd.f32 0.0, %v241
  %v243 = vpop.f32.mrb[0].mxu0
  %v244 = vadd.f32 0.0, %v243
  %v245 = vpop.f32.mrb[0].mxu0
  %v246 = vadd.f32 0.0, %v245
  %v247 = vpop.f32.mrb[0].mxu0
  %v248 = vadd.f32 0.0, %v247
  %249 = vdwg.mxu0
  %250 = vst [vmem:[%s3] sm:$0xff] %v172
  %251 = vst [vmem:[%s3 + $0x8] sm:$0xff] %v174
  %252 = vst [vmem:[%s3 + $0x10] sm:$0xff] %v176
  %253 = vst [vmem:[%s3 + $0x18] sm:$0xff] %v178
  %254 = vst [vmem:[%s3 + $0x20] sm:$0xff] %v182
  %255 = vst [vmem:[%s3 + $0x28] sm:$0xff] %v184
  %256 = vst [vmem:[%s3 + $0x30] sm:$0xff] %v186
  %257 = vst [vmem:[%s3 + $0x38] sm:$0xff] %v188
  %258 = vst [vmem:[%s3 + $0x40] sm:$0xff] %v192
  %259 = vst [vmem:[%s3 + $0x48] sm:$0xff] %v194
  %260 = vst [vmem:[%s3 + $0x50] sm:$0xff] %v196
  %261 = vst [vmem:[%s3 + $0x58] sm:$0xff] %v198
  %262 = vst [vmem:[%s3 + $0x60] sm:$0xff] %v202
  %263 = vst [vmem:[%s3 + $0x68] sm:$0xff] %v204
  %264 = vst [vmem:[%s3 + $0x70] sm:$0xff] %v206
  %265 = vst [vmem:[%s3 + $0x78] sm:$0xff] %v208
  %266 = vst [vmem:[%s3 + $0x80] sm:$0xff] %v212
  %267 = vst [vmem:[%s3 + $0x88] sm:$0xff] %v214
  %268 = vst [vmem:[%s3 + $0x90] sm:$0xff] %v216
  %269 = vst [vmem:[%s3 + $0x98] sm:$0xff] %v218
  %270 = vst [vmem:[%s3 + $0xa0] sm:$0xff] %v222
  %271 = vst [vmem:[%s3 + $0xa8] sm:$0xff] %v224
  %272 = vst [vmem:[%s3 + $0xb0] sm:$0xff] %v226
  %273 = vst [vmem:[%s3 + $0xb8] sm:$0xff] %v228
  %274 = vst [vmem:[%s3 + $0xc0] sm:$0xff] %v232
  %275 = vst [vmem:[%s3 + $0xc8] sm:$0xff] %v234
  %276 = vst [vmem:[%s3 + $0xd0] sm:$0xff] %v236
  %277 = vst [vmem:[%s3 + $0xd8] sm:$0xff] %v238
  %278 = vst [vmem:[%s3 + $0xe0] sm:$0xff] %v242
  %279 = vst [vmem:[%s3 + $0xe8] sm:$0xff] %v244
  %280 = vst [vmem:[%s3 + $0xf0] sm:$0xff] %v246
  %281 = vst [vmem:[%s3 + $0xf8] sm:$0xff] %v248
  %v282 = vpack.c.bf16 %v176, %v172
  %v283 = vpack.c.bf16 %v178, %v174
  %v284 = vpack.c.bf16 %v186, %v182
  %v285 = vpack.c.bf16 %v188, %v184
  %v286 = vpack.c.bf16 %v196, %v192
  %v287 = vpack.c.bf16 %v198, %v194
  %v288 = vpack.c.bf16 %v206, %v202
  %v289 = vpack.c.bf16 %v208, %v204
  %v290 = vpack.c.bf16 %v216, %v212
  %v291 = vpack.c.bf16 %v218, %v214
  %v292 = vpack.c.bf16 %v226, %v222
  %v293 = vpack.c.bf16 %v228, %v224
  %v294 = vpack.c.bf16 %v236, %v232
  %v295 = vpack.c.bf16 %v238, %v234
  %v296 = vpack.c.bf16 %v246, %v242
  %v297 = vpack.c.bf16 %v248, %v244
  %v298 = vld [vmem:[%s2] sm:$0xf]
  %v299 = vld [vmem:[%s2 + $0x4] sm:$0xf]
  %v300 = vld [vmem:[%s2 + $0x8] sm:$0xf]
  %v301 = vld [vmem:[%s2 + $0xc] sm:$0xf]
  %v302 = vld [vmem:[%s2 + $0x10] sm:$0xf]
  %v303 = vld [vmem:[%s2 + $0x14] sm:$0xf]
  %v304 = vld [vmem:[%s2 + $0x18] sm:$0xf]
  %v305 = vld [vmem:[%s2 + $0x1c] sm:$0xf]
  %v306 = vld [vmem:[%s2 + $0x20] sm:$0xf]
  %v307 = vld [vmem:[%s2 + $0x24] sm:$0xf]
  %v308 = vld [vmem:[%s2 + $0x28] sm:$0xf]
  %v309 = vld [vmem:[%s2 + $0x2c] sm:$0xf]
  %v310 = vld [vmem:[%s2 + $0x30] sm:$0xf]
  %v311 = vld [vmem:[%s2 + $0x34] sm:$0xf]
  %v312 = vld [vmem:[%s2 + $0x38] sm:$0xf]
  %v313 = vld [vmem:[%s2 + $0x3c] sm:$0xf]
  %v314 = vld [vmem:[%s2 + $0x40] sm:$0xf]
  %v315 = vld [vmem:[%s2 + $0x44] sm:$0xf]
  %v316 = vld [vmem:[%s2 + $0x48] sm:$0xf]
  %v317 = vld [vmem:[%s2 + $0x4c] sm:$0xf]
  %v318 = vld [vmem:[%s2 + $0x50] sm:$0xf]
  %v319 = vld [vmem:[%s2 + $0x54] sm:$0xf]
  %v320 = vld [vmem:[%s2 + $0x58] sm:$0xf]
  %v321 = vld [vmem:[%s2 + $0x5c] sm:$0xf]
  %v322 = vld [vmem:[%s2 + $0x60] sm:$0xf]
  %v323 = vld [vmem:[%s2 + $0x64] sm:$0xf]
  %v324 = vld [vmem:[%s2 + $0x68] sm:$0xf]
  %v325 = vld [vmem:[%s2 + $0x6c] sm:$0xf]
  %v326 = vld [vmem:[%s2 + $0x70] sm:$0xf]
  %v327 = vld [vmem:[%s2 + $0x74] sm:$0xf]
  %v328 = vld [vmem:[%s2 + $0x78] sm:$0xf]
  %v329 = vld [vmem:[%s2 + $0x7c] sm:$0xf]
  %v362 = vunpack.c.l.b16 %v298
  %v363 = vunpack.c.l.b16 %v299
  %v364 = vunpack.c.l.b16 %v300
  %v365 = vunpack.c.l.b16 %v301
  %v366 = vunpack.c.l.b16 %v302
  %v367 = vunpack.c.l.b16 %v303
  %v368 = vunpack.c.l.b16 %v304
  %v369 = vunpack.c.l.b16 %v305
  %v370 = vunpack.c.l.b16 %v306
  %v371 = vunpack.c.l.b16 %v307
  %v372 = vunpack.c.l.b16 %v308
  %v373 = vunpack.c.l.b16 %v309
  %v374 = vunpack.c.l.b16 %v310
  %v375 = vunpack.c.l.b16 %v311
  %v376 = vunpack.c.l.b16 %v312
  %v377 = vunpack.c.l.b16 %v313
  %v378 = vunpack.c.l.b16 %v314
  %v379 = vunpack.c.l.b16 %v315
  %v380 = vunpack.c.l.b16 %v316
  %v381 = vunpack.c.l.b16 %v317
  %v382 = vunpack.c.l.b16 %v318
  %v383 = vunpack.c.l.b16 %v319
  %v384 = vunpack.c.l.b16 %v320
  %v385 = vunpack.c.l.b16 %v321
  %v386 = vunpack.c.l.b16 %v322
  %v387 = vunpack.c.l.b16 %v323
  %v388 = vunpack.c.l.b16 %v324
  %v389 = vunpack.c.l.b16 %v325
  %v390 = vunpack.c.l.b16 %v326
  %v391 = vunpack.c.l.b16 %v327
  %v392 = vunpack.c.l.b16 %v328
  %v393 = vunpack.c.l.b16 %v329
  %v394 = vpack.c.b16 %v363, %v362
  %v395 = vpack.c.b16 %v365, %v364
  %v396 = vpack.c.b16 %v367, %v366
  %v397 = vpack.c.b16 %v369, %v368
  %v398 = vpack.c.b16 %v371, %v370
  %v399 = vpack.c.b16 %v373, %v372
  %v400 = vpack.c.b16 %v375, %v374
  %v401 = vpack.c.b16 %v377, %v376
  %v402 = vpack.c.b16 %v379, %v378
  %v403 = vpack.c.b16 %v381, %v380
  %v404 = vpack.c.b16 %v383, %v382
  %v405 = vpack.c.b16 %v385, %v384
  %v406 = vpack.c.b16 %v387, %v386
  %v407 = vpack.c.b16 %v389, %v388
  %v408 = vpack.c.b16 %v391, %v390
  %v409 = vpack.c.b16 %v393, %v392
  %426 = vmatprep.subr.bf16.mxu0 0
  %427 = vmatpush1.bf16.msra.mxu0 %v394
  %428 = vmatprep.subr.bf16.mxu0 0
  %429 = vmatpush1.bf16.msra.mxu0 %v395
  %430 = vmatprep.subr.bf16.mxu0 0
  %431 = vmatpush1.bf16.msra.mxu0 %v396
  %432 = vmatprep.subr.bf16.mxu0 0
  %433 = vmatpush1.bf16.msra.mxu0 %v397
  %434 = vmatprep.subr.bf16.mxu0 0
  %435 = vmatpush1.bf16.msra.mxu0 %v398
  %436 = vmatprep.subr.bf16.mxu0 0
  %437 = vmatpush1.bf16.msra.mxu0 %v399
  %438 = vmatprep.subr.bf16.mxu0 0
  %439 = vmatpush1.bf16.msra.mxu0 %v400
  %440 = vmatprep.subr.bf16.mxu0 0
  %441 = vmatpush1.bf16.msra.mxu0 %v401
  %442 = vmatprep.subr.bf16.mxu0 0
  %443 = vmatpush1.bf16.msra.mxu0 %v402
  %444 = vmatprep.subr.bf16.mxu0 0
  %445 = vmatpush1.bf16.msra.mxu0 %v403
  %446 = vmatprep.subr.bf16.mxu0 0
  %447 = vmatpush1.bf16.msra.mxu0 %v404
  %448 = vmatprep.subr.bf16.mxu0 0
  %449 = vmatpush1.bf16.msra.mxu0 %v405
  %450 = vmatprep.subr.bf16.mxu0 0
  %451 = vmatpush1.bf16.msra.mxu0 %v406
  %452 = vmatprep.subr.bf16.mxu0 0
  %453 = vmatpush1.bf16.msra.mxu0 %v407
  %454 = vmatprep.subr.bf16.mxu0 0
  %455 = vmatpush1.bf16.msra.mxu0 %v408
  %456 = vmatprep.subr.bf16.mxu0 0
  %457 = vmatpush1.bf16.msra.mxu0 %v409
  %458 = vmatprep.mubr.bf16.mxu0 %v283
  %459 = vmatmul.mubr.bf16.gmra.mrb[0].mxu0 %v282
  %v460 = vpop.f32.mrb[0].mxu0
  %v461 = vadd.f32 0.0, %v460
  %v462 = vpop.f32.mrb[0].mxu0
  %v463 = vpop.f32.mrb[0].mxu0
  %v464 = vadd.f32 0.0, %v463
  %v465 = vpop.f32.mrb[0].mxu0
  %466 = vmatprep.mubr.bf16.mxu0 %v285
  %467 = vmatmul.mubr.bf16.gmra.mrb[0].mxu0 %v284
  %v468 = vpop.f32.mrb[0].mxu0
  %v469 = vadd.f32 0.0, %v468
  %v470 = vpop.f32.mrb[0].mxu0
  %v471 = vpop.f32.mrb[0].mxu0
  %v472 = vadd.f32 0.0, %v471
  %v473 = vpop.f32.mrb[0].mxu0
  %474 = vmatprep.mubr.bf16.mxu0 %v287
  %475 = vmatmul.mubr.bf16.gmra.mrb[0].mxu0 %v286
  %v476 = vpop.f32.mrb[0].mxu0
  %v477 = vadd.f32 0.0, %v476
  %v478 = vpop.f32.mrb[0].mxu0
  %v479 = vpop.f32.mrb[0].mxu0
  %v480 = vadd.f32 0.0, %v479
  %v481 = vpop.f32.mrb[0].mxu0
  %482 = vmatprep.mubr.bf16.mxu0 %v289
  %483 = vmatmul.mubr.bf16.gmra.mrb[0].mxu0 %v288
  %v484 = vpop.f32.mrb[0].mxu0
  %v485 = vadd.f32 0.0, %v484
  %v486 = vpop.f32.mrb[0].mxu0
  %v487 = vpop.f32.mrb[0].mxu0
  %v488 = vadd.f32 0.0, %v487
  %v489 = vpop.f32.mrb[0].mxu0
  %490 = vmatprep.mubr.bf16.mxu0 %v291
  %491 = vmatmul.mubr.bf16.gmra.mrb[0].mxu0 %v290
  %v492 = vpop.f32.mrb[0].mxu0
  %v493 = vadd.f32 0.0, %v492
  %v494 = vpop.f32.mrb[0].mxu0
  %v495 = vpop.f32.mrb[0].mxu0
  %v496 = vadd.f32 0.0, %v495
  %v497 = vpop.f32.mrb[0].mxu0
  %498 = vmatprep.mubr.bf16.mxu0 %v293
  %499 = vmatmul.mubr.bf16.gmra.mrb[0].mxu0 %v292
  %v500 = vpop.f32.mrb[0].mxu0
  %v501 = vadd.f32 0.0, %v500
  %v502 = vpop.f32.mrb[0].mxu0
  %v503 = vpop.f32.mrb[0].mxu0
  %v504 = vadd.f32 0.0, %v503
  %v505 = vpop.f32.mrb[0].mxu0
  %506 = vmatprep.mubr.bf16.mxu0 %v295
  %507 = vmatmul.mubr.bf16.gmra.mrb[0].mxu0 %v294
  %v508 = vpop.f32.mrb[0].mxu0
  %v509 = vadd.f32 0.0, %v508
  %v510 = vpop.f32.mrb[0].mxu0
  %v511 = vpop.f32.mrb[0].mxu0
  %v512 = vadd.f32 0.0, %v511
  %v513 = vpop.f32.mrb[0].mxu0
  %514 = vmatprep.mubr.bf16.mxu0 %v297
  %515 = vmatmul.mubr.bf16.gmra.mrb[0].mxu0 %v296
  %v516 = vpop.f32.mrb[0].mxu0
  %v517 = vadd.f32 0.0, %v516
  %v518 = vpop.f32.mrb[0].mxu0
  %v519 = vpop.f32.mrb[0].mxu0
  %v520 = vadd.f32 0.0, %v519
  %v521 = vpop.f32.mrb[0].mxu0
  %522 = vdwg.mxu0
  %523 = vst [vmem:[%s4] sm:$0xff] %v461
  %524 = vst [vmem:[%s4 + $0x8] sm:$0xff] %v464
  %525 = vst [vmem:[%s4 + $0x10] sm:$0xff] %v469
  %526 = vst [vmem:[%s4 + $0x18] sm:$0xff] %v472
  %527 = vst [vmem:[%s4 + $0x20] sm:$0xff] %v477
  %528 = vst [vmem:[%s4 + $0x28] sm:$0xff] %v480
  %529 = vst [vmem:[%s4 + $0x30] sm:$0xff] %v485
  %530 = vst [vmem:[%s4 + $0x38] sm:$0xff] %v488
  %531 = vst [vmem:[%s4 + $0x40] sm:$0xff] %v493
  %532 = vst [vmem:[%s4 + $0x48] sm:$0xff] %v496
  %533 = vst [vmem:[%s4 + $0x50] sm:$0xff] %v501
  %534 = vst [vmem:[%s4 + $0x58] sm:$0xff] %v504
  %535 = vst [vmem:[%s4 + $0x60] sm:$0xff] %v509
  %536 = vst [vmem:[%s4 + $0x68] sm:$0xff] %v512
  %537 = vst [vmem:[%s4 + $0x70] sm:$0xff] %v517
  %538 = vst [vmem:[%s4 + $0x78] sm:$0xff] %v520
  // Predicated region
  $region14: #{_lambda_.11} parent=0 // pred_check
    _
  $region15: #{_lambda_.11} parent=0 // pred_check_branch
    %540 = sbr.rel (0) target = $region17
  $region16: #{_lambda_.11} parent=0 // pred_region
    _
  $region17: #{_lambda_.11} parent=0 // pred_fallthru
    _
  // Predicated region
  $region18: #{_lambda_.11} parent=0 // pred_check
    _
  $region19: #{_lambda_.11} parent=0 // pred_check_branch
    %542 = sbr.rel (0) target = $region21
  $region20: #{_lambda_.11} parent=0 // pred_region
    _
  $region21: #{_lambda_.11} parent=0 // pred_fallthru
    _
  // Predicated region
  $region22: #{_lambda_.11} parent=0 // pred_check
    _
  $region23: #{_lambda_.11} parent=0 // pred_check_branch
    %544 = sbr.rel (0) target = $region25
  $region24: #{_lambda_.11} parent=0 // pred_region
    _
  $region25: #{_lambda_.11} parent=0 // pred_fallthru
    _
  // Predicated region
  $region26: #{_lambda_.11} parent=0 // pred_check
    _
  $region27: #{_lambda_.11} parent=0 // pred_check_branch
    %546 = sbr.rel (0) target = $region29
  $region28: #{_lambda_.11} parent=0 // pred_region
    _
  $region29: #{_lambda_.11} parent=0 // pred_fallthru
    _

// kernel: _lambda_.13
$region0: #{_lambda_.13}
  #allocation0 [shape = 'u32[]', space=smem, size = 0x4, offset = 0x4, fixed_abs, tag = 'smem constant byte address 0x4 - core index']
  #allocation1 [shape = 'u32[144,128]{1,0:T(1,128)}', space=vmem, size = 0x12000, scoped, tag = 'internal scratch']
  #allocation2 [shape = 'f32[128,128]{1,0:T(8,128)}', space=vmem, size = 0x10000, scoped, tag = 'scratch operand']
  %s0 = inlined_call_operand.vmem [shape: bf16[2,128,128], index: 0, kind: input, shape index: {}]
  %s1 = inlined_call_operand.vmem [shape: f32[128,256], index: 1, kind: input, shape index: {}, may-alias: {1,2}]
  %s2 = inlined_call_operand.vmem [shape: f32[128,256], index: 2, kind: input, shape index: {}, may-alias: {1,2}]
  %s3 = inlined_call_operand.vmem [shape: f32[128,256], index: 3, kind: output, shape index: {}]
  %s4 = sld [smem:[#allocation0]]
  $region163: #{_lambda_.13} parent=0
    _
  %s6 = ssub.s32 1, %s4
  %s7 = scalar_select 0, %s6, %s4
  $region1: #{_lambda_.13} parent=0
    #allocation3 [shape = 'u8[131072]{0}', space=vmem, size = 0x20000, scoped, tag = 'input window, operand 1']
    #allocation4 [shape = 'u8[131072]{0}', space=vmem, size = 0x20000, scoped, tag = 'input window, operand 2']
    #allocation5 [shape = 'u8[131072]{0}', space=vmem, size = 0x20000, scoped, tag = 'output window, operand 0']
    loop: start=0, step=1, limit=4
    $region2: #{_lambda_.13} parent=1 // loop_pre_header
      _
    $region3: #{_lambda_.13} parent=1 // loop_header
      %s9 = sphi 0, %s13
      %p10 = scmp.ge.s32.totalorder %s9, 4
      %s16 = sphi 0, %s35
      %s17 = sphi 0, %s31
      %s18 = sphi 0, %s27
      %s19 = sphi 0, %s16
      %s20 = sphi 0, %s17
      %s21 = sphi 0, %s18
      %s22 = sphi 0, %s19
      %s23 = sphi 0, %s20
      %s24 = sphi 0, %s21
      %s42 = sphi 0, %s44
      %s45 = sphi 0, %s42
      %s46 = sphi 0, %s45
      %s62 = sphi 0, %s46
      %s70 = sphi 0, %s72
      %s73 = sphi 0, %s70
      %s74 = sphi 0, %s73
      %s90 = sphi 0, %s74
      %s98 = sphi 0, %s100
      %s101 = sphi 0, %s98
      %s102 = sphi 0, %s101
      %s118 = sphi 0, %s102
      %s126 = sphi 0, %s128
      %s129 = sphi 0, %s126
      %s130 = sphi 0, %s129
      %s146 = sphi 0, %s130
    $region4: #{_lambda_.13} parent=1 // loop_header_branch
      %12 = sbr.rel (%p10) target = $region8
    $region5: #{_lambda_.13} parent=1 // loop_body
      %s14 = ssub.s32 %s9, 1
      %s15 = ssub.s32 %s9, 2
      %s25 = sadd.s32 1, %s18
      %p26 = scmp.ge.s32.totalorder %s25, 1
      %s27 = scalar_select %p26, 0, %s25
      %s28 = sadd.s32 1, %s17
      %s29 = scalar_select %p26, %s28, %s17
      %p30 = scmp.ge.s32.totalorder %s29, 1
      %s31 = scalar_select %p30, 0, %s29
      %s32 = sadd.s32 1, %s16
      %s33 = scalar_select %p30, %s32, %s16
      %p34 = scmp.ge.s32.totalorder %s33, 2
      %s35 = scalar_select %p34, 0, %s33
      %s36 = ssub.s32 %s16, %s35
      %s37 = ssub.s32 %s17, %s31
      %s38 = sor.u32 %s36, %s37
      %s39 = ssub.s32 %s18, %s27
      %s40 = sor.u32 %s38, %s39
      %p41 = scmp.eq.s32.totalorder %s40, 0
      %s43 = sadd.s32 %s42, 1
      %s44 = scalar_select %p41, %s42, %s43
      %p47 = pneg %p41
      %p48 = scmp.eq.s32.totalorder %s9, 1
      %p49 = por %p47, %p48
      %p50 = scmp.ne.s32.totalorder %s42, %s45
      %p51 = scmp.eq.s32.totalorder %s9, 0
      %p52 = por %p50, %p51
      %p53 = scmp.ne.s32.totalorder %s42, %s45
      %p54 = scmp.eq.s32.totalorder %s14, 1
      %p55 = por %p53, %p54
      %p56 = scmp.ne.s32.totalorder %s45, %s46
      %p57 = scmp.eq.s32.totalorder %s14, 0
      %p58 = por %p56, %p57
      %p59 = scmp.ne.s32.totalorder %s45, %s46
      %p60 = scmp.eq.s32.totalorder %s15, 1
      %p61 = por %p59, %p60
      %p63 = scmp.ne.s32.totalorder %s46, %s62
      %p64 = scmp.eq.s32.totalorder %s15, 0
      %p65 = por %p63, %p64
      %s66 = ssub.s32 %s18, %s27
      %s67 = ssub.s32 %s16, %s35
      %s68 = sor.u32 %s66, %s67
      %p69 = scmp.eq.s32.totalorder %s68, 0
      %s71 = sadd.s32 %s70, 1
      %s72 = scalar_select %p69, %s70, %s71
      %p75 = pneg %p69
      %p76 = scmp.eq.s32.totalorder %s9, 1
      %p77 = por %p75, %p76
      %p78 = scmp.ne.s32.totalorder %s70, %s73
      %p79 = scmp.eq.s32.totalorder %s9, 0
      %p80 = por %p78, %p79
      %p81 = scmp.ne.s32.totalorder %s70, %s73
      %p82 = scmp.eq.s32.totalorder %s14, 1
      %p83 = por %p81, %p82
      %p84 = scmp.ne.s32.totalorder %s73, %s74
      %p85 = scmp.eq.s32.totalorder %s14, 0
      %p86 = por %p84, %p85
      %p87 = scmp.ne.s32.totalorder %s73, %s74
      %p88 = scmp.eq.s32.totalorder %s15, 1
      %p89 = por %p87, %p88
      %p91 = scmp.ne.s32.totalorder %s74, %s90
      %p92 = scmp.eq.s32.totalorder %s15, 0
      %p93 = por %p91, %p92
      %s94 = ssub.s32 %s17, %s31
      %s95 = ssub.s32 %s16, %s35
      %s96 = sor.u32 %s94, %s95
      %p97 = scmp.eq.s32.totalorder %s96, 0
      %s99 = sadd.s32 %s98, 1
      %s100 = scalar_select %p97, %s98, %s99
      %p103 = pneg %p97
      %p104 = scmp.eq.s32.totalorder %s9, 1
      %p105 = por %p103, %p104
      %p106 = scmp.ne.s32.totalorder %s98, %s101
      %p107 = scmp.eq.s32.totalorder %s9, 0
      %p108 = por %p106, %p107
      %p109 = scmp.ne.s32.totalorder %s98, %s101
      %p110 = scmp.eq.s32.totalorder %s14, 1
      %p111 = por %p109, %p110
      %p112 = scmp.ne.s32.totalorder %s101, %s102
      %p113 = scmp.eq.s32.totalorder %s14, 0
      %p114 = por %p112, %p113
      %p115 = scmp.ne.s32.totalorder %s101, %s102
      %p116 = scmp.eq.s32.totalorder %s15, 1
      %p117 = por %p115, %p116
      %p119 = scmp.ne.s32.totalorder %s102, %s118
      %p120 = scmp.eq.s32.totalorder %s15, 0
      %p121 = por %p119, %p120
      %s122 = ssub.s32 %s17, %s31
      %s123 = ssub.s32 %s16, %s35
      %s124 = sor.u32 %s122, %s123
      %p125 = scmp.eq.s32.totalorder %s124, 0
      %s127 = sadd.s32 %s126, 1
      %s128 = scalar_select %p125, %s126, %s127
      %p131 = pneg %p125
      %p132 = scmp.eq.s32.totalorder %s9, 1
      %p133 = por %p131, %p132
      %p134 = scmp.ne.s32.totalorder %s126, %s129
      %p135 = scmp.eq.s32.totalorder %s9, 0
      %p136 = por %p134, %p135
      %p137 = scmp.ne.s32.totalorder %s126, %s129
      %p138 = scmp.eq.s32.totalorder %s14, 1
      %p139 = por %p137, %p138
      %p140 = scmp.ne.s32.totalorder %s129, %s130
      %p141 = scmp.eq.s32.totalorder %s14, 0
      %p142 = por %p140, %p141
      %p143 = scmp.ne.s32.totalorder %s129, %s130
      %p144 = scmp.eq.s32.totalorder %s15, 1
      %p145 = por %p143, %p144
      %p147 = scmp.ne.s32.totalorder %s130, %s146
      %p148 = scmp.eq.s32.totalorder %s15, 0
      %p149 = por %p147, %p148
      %p150 = scmp.le.s32.totalorder 1, %s9
      %p151 = scmp.lt.s32.totalorder %s9, 3
      %p152 = pnand %p150, %p151
      %p153 = pneg %p152
      // Predicated region
      $region9: #{_lambda_.13} parent=5 // pred_check
        _
      $region10: #{_lambda_.13} parent=5 // pred_check_branch
        %155 = sbr.rel (%p152) target = $region12
      $region11: #{_lambda_.13} parent=5 // pred_region
        %s156 = ssub.s32 %s9, 1
      $region12: #{_lambda_.13} parent=5 // pred_fallthru
        _
      %p157 = scmp.lt.s32.totalorder %s9, 2
      // Predicated region
      $region13: #{_lambda_.13} parent=5 // pred_check
        %p158 = pneg %p157
      $region14: #{_lambda_.13} parent=5 // pred_check_branch
        %160 = sbr.rel (%p158) target = $region16
      $region15: #{_lambda_.13} parent=5 // pred_region
        // Predicated region
        $region17: #{_lambda_.13} parent=15 // pred_check
          %p161 = pneg %p52
        $region18: #{_lambda_.13} parent=15 // pred_check_branch
          %163 = sbr.rel (%p161) target = $region20
        $region19: #{_lambda_.13} parent=15 // pred_region
          %s164 = smul.u32 16, %s17
          %p165 = scmp.lt.s32.totalorder %s16, 1
          %s166 = scalar_select %p165, %s16, 1
          %p167 = scmp.lt.s32.totalorder %s164, 15
          %s168 = scalar_select %p167, %s164, 15
          %p169 = scmp.lt.s32.totalorder %s18, 0
          %s170 = scalar_select %p169, %s18, 0
          %s171 = sadd.s32 %s170, %s168
          %s172 = smul.addr %s166, 16
          %s173 = sadd.s32 %s171, %s172
          %s174 = smul.addr %s173, 4
          %s175 = scalar_lea.vmem %s0, %s174
          %s176 = smul.u32 16, %s17
        $region20: #{_lambda_.13} parent=15 // pred_fallthru
          _
        // Predicated region
        $region21: #{_lambda_.13} parent=15 // pred_check
          %p177 = pneg %p80
        $region22: #{_lambda_.13} parent=15 // pred_check_branch
          %179 = sbr.rel (%p177) target = $region24
        $region23: #{_lambda_.13} parent=15 // pred_region
          %s180 = sand.u32 %s70, 1
          %s181 = sand.u32 %s70, 1
          %s182 = smul.addr %s181, 128
          %s183 = scalar_lea.vmem [#allocation3], %s182
          %s184 = smul.u32 16, %s18
          %s185 = smul.addr %s184, 2
          %s186 = sadd.s32 %s16, %s185
          %s187 = smul.addr %s186, 8
          %s188 = scalar_lea.vmem %s1, %s187
          // Predicated region
          $region25: #{_lambda_.13} parent=23 // pred_check
            _
          $region26: #{_lambda_.13} parent=23 // pred_check_branch
            %190 = sbr.rel (0) target = $region28
          $region27: #{_lambda_.13} parent=23 // pred_region
            // Predicated region
            $region29: #{_lambda_.13} parent=27 // pred_check
              _
            $region30: #{_lambda_.13} parent=27 // pred_check_branch
              %192 = sbr.rel (0) target = $region32
            $region31: #{_lambda_.13} parent=27 // pred_region
              // Predicated region
              $region44: #{_lambda_.13} parent=31 // pred_check
                _
              $region45: #{_lambda_.13} parent=31 // pred_check_branch
                %237 = sbr.rel (0) target = $region47
              $region46: #{_lambda_.13} parent=31 // pred_region
                loop: start=0, step=1, limit=1
                $region48: #{_lambda_.13} parent=46 // loop_pre_header
                  _
                $region49: #{_lambda_.13} parent=46 // loop_header
                  %s239 = sphi 0, %s243
                  %p240 = scmp.ge.s32.totalorder %s239, 1
                  %s244 = sphi %s188, %s188
                  %s245 = sphi %s183, %s183
                $region50: #{_lambda_.13} parent=46 // loop_header_branch
                  %242 = sbr.rel (%p240) target = $region54
                $region51: #{_lambda_.13} parent=46 // loop_body
                  %v246 = vld [vmem:[%s244] sm:$0xff]
                  %247 = vst [vmem:[%s245] sm:$0xff] %v246
                  %v248 = vld [vmem:[%s244 + $0x10] sm:$0xff]
                  %249 = vst [vmem:[%s245 + $0x8] sm:$0xff] %v248
                  %v250 = vld [vmem:[%s244 + $0x20] sm:$0xff]
                  %251 = vst [vmem:[%s245 + $0x10] sm:$0xff] %v250
                  %v252 = vld [vmem:[%s244 + $0x30] sm:$0xff]
                  %253 = vst [vmem:[%s245 + $0x18] sm:$0xff] %v252
                  %v254 = vld [vmem:[%s244 + $0x40] sm:$0xff]
                  %255 = vst [vmem:[%s245 + $0x20] sm:$0xff] %v254
                  %v256 = vld [vmem:[%s244 + $0x50] sm:$0xff]
                  %257 = vst [vmem:[%s245 + $0x28] sm:$0xff] %v256
                  %v258 = vld [vmem:[%s244 + $0x60] sm:$0xff]
                  %259 = vst [vmem:[%s245 + $0x30] sm:$0xff] %v258
                  %v260 = vld [vmem:[%s244 + $0x70] sm:$0xff]
                  %261 = vst [vmem:[%s245 + $0x38] sm:$0xff] %v260
                  %v262 = vld [vmem:[%s244 + $0x80] sm:$0xff]
                  %263 = vst [vmem:[%s245 + $0x40] sm:$0xff] %v262
                  %v264 = vld [vmem:[%s244 + $0x90] sm:$0xff]
                  %265 = vst [vmem:[%s245 + $0x48] sm:$0xff] %v264
                  %v266 = vld [vmem:[%s244 + $0xa0] sm:$0xff]
                  %267 = vst [vmem:[%s245 + $0x50] sm:$0xff] %v266
                  %v268 = vld [vmem:[%s244 + $0xb0] sm:$0xff]
                  %269 = vst [vmem:[%s245 + $0x58] sm:$0xff] %v268
                  %v270 = vld [vmem:[%s244 + $0xc0] sm:$0xff]
                  %271 = vst [vmem:[%s245 + $0x60] sm:$0xff] %v270
                  %v272 = vld [vmem:[%s244 + $0xd0] sm:$0xff]
                  %273 = vst [vmem:[%s245 + $0x68] sm:$0xff] %v272
                  %v274 = vld [vmem:[%s244 + $0xe0] sm:$0xff]
                  %275 = vst [vmem:[%s245 + $0x70] sm:$0xff] %v274
                  %v276 = vld [vmem:[%s244 + $0xf0] sm:$0xff]
                  %277 = vst [vmem:[%s245 + $0x78] sm:$0xff] %v276
                $region52: #{_lambda_.13} parent=46 // loop_footer
                  %s243 = sadd.s32 1, %s239
                $region53: #{_lambda_.13} parent=46 // loop_footer_branch
                  %238 = sbr.rel target = $region49
                $region54: #{_lambda_.13} parent=46 // loop_exit
                  _
              $region47: #{_lambda_.13} parent=31 // pred_fallthru
                _
              // Predicated region
              $region55: #{_lambda_.13} parent=31 // pred_check
                _
              $region56: #{_lambda_.13} parent=31 // pred_check_branch
                %279 = sbr.rel target = $region58
              $region57: #{_lambda_.13} parent=31 // pred_region
                _
              $region58: #{_lambda_.13} parent=31 // pred_fallthru
                _
            $region32: #{_lambda_.13} parent=27 // pred_fallthru
              _
            // Predicated region
            $region33: #{_lambda_.13} parent=27 // pred_check
              _
            $region34: #{_lambda_.13} parent=27 // pred_check_branch
              %194 = sbr.rel target = $region36
            $region35: #{_lambda_.13} parent=27 // pred_region
              loop: start=0, step=1, limit=1
              $region37: #{_lambda_.13} parent=35 // loop_pre_header
                _
              $region38: #{_lambda_.13} parent=35 // loop_header
                %s197 = sphi 0, %s201
                %p198 = scmp.ge.s32.totalorder %s197, 1
                %s202 = sphi %s188, %s188
                %s203 = sphi %s183, %s183
              $region39: #{_lambda_.13} parent=35 // loop_header_branch
                %200 = sbr.rel (%p198) target = $region43
              $region40: #{_lambda_.13} parent=35 // loop_body
                %v204 = vld [vmem:[%s202] sm:$0xff]
                %205 = vst [vmem:[%s203] sm:$0xff] %v204
                %v206 = vld [vmem:[%s202 + $0x10] sm:$0xff]
                %207 = vst [vmem:[%s203 + $0x8] sm:$0xff] %v206
                %v208 = vld [vmem:[%s202 + $0x20] sm:$0xff]
                %209 = vst [vmem:[%s203 + $0x10] sm:$0xff] %v208
                %v210 = vld [vmem:[%s202 + $0x30] sm:$0xff]
                %211 = vst [vmem:[%s203 + $0x18] sm:$0xff] %v210
                %v212 = vld [vmem:[%s202 + $0x40] sm:$0xff]
                %213 = vst [vmem:[%s203 + $0x20] sm:$0xff] %v212
                %v214 = vld [vmem:[%s202 + $0x50] sm:$0xff]
                %215 = vst [vmem:[%s203 + $0x28] sm:$0xff] %v214
                %v216 = vld [vmem:[%s202 + $0x60] sm:$0xff]
                %217 = vst [vmem:[%s203 + $0x30] sm:$0xff] %v216
                %v218 = vld [vmem:[%s202 + $0x70] sm:$0xff]
                %219 = vst [vmem:[%s203 + $0x38] sm:$0xff] %v218
                %v220 = vld [vmem:[%s202 + $0x80] sm:$0xff]
                %221 = vst [vmem:[%s203 + $0x40] sm:$0xff] %v220
                %v222 = vld [vmem:[%s202 + $0x90] sm:$0xff]
                %223 = vst [vmem:[%s203 + $0x48] sm:$0xff] %v222
                %v224 = vld [vmem:[%s202 + $0xa0] sm:$0xff]
                %225 = vst [vmem:[%s203 + $0x50] sm:$0xff] %v224
                %v226 = vld [vmem:[%s202 + $0xb0] sm:$0xff]
                %227 = vst [vmem:[%s203 + $0x58] sm:$0xff] %v226
                %v228 = vld [vmem:[%s202 + $0xc0] sm:$0xff]
                %229 = vst [vmem:[%s203 + $0x60] sm:$0xff] %v228
                %v230 = vld [vmem:[%s202 + $0xd0] sm:$0xff]
                %231 = vst [vmem:[%s203 + $0x68] sm:$0xff] %v230
                %v232 = vld [vmem:[%s202 + $0xe0] sm:$0xff]
                %233 = vst [vmem:[%s203 + $0x70] sm:$0xff] %v232
                %v234 = vld [vmem:[%s202 + $0xf0] sm:$0xff]
                %235 = vst [vmem:[%s203 + $0x78] sm:$0xff] %v234
              $region41: #{_lambda_.13} parent=35 // loop_footer
                %s201 = sadd.s32 1, %s197
              $region42: #{_lambda_.13} parent=35 // loop_footer_branch
                %196 = sbr.rel target = $region38
              $region43: #{_lambda_.13} parent=35 // loop_exit
                _
            $region36: #{_lambda_.13} parent=27 // pred_fallthru
              _
          $region28: #{_lambda_.13} parent=23 // pred_fallthru
            _
          %280 = vnop
        $region24: #{_lambda_.13} parent=15 // pred_fallthru
          _
        // Predicated region
        $region59: #{_lambda_.13} parent=15 // pred_check
          %p281 = pneg %p108
        $region60: #{_lambda_.13} parent=15 // pred_check_branch
          %283 = sbr.rel (%p281) target = $region62
        $region61: #{_lambda_.13} parent=15 // pred_region
          %s284 = sand.u32 %s98, 1
          %s285 = sand.u32 %s98, 1
          %s286 = smul.addr %s285, 128
          %s287 = scalar_lea.vmem [#allocation4], %s286
          %s288 = smul.u32 16, %s17
          %s289 = smul.addr %s288, 2
          %s290 = sadd.s32 %s16, %s289
          %s291 = smul.addr %s290, 8
          %s292 = scalar_lea.vmem %s2, %s291
          // Predicated region
          $region63: #{_lambda_.13} parent=61 // pred_check
            _
          $region64: #{_lambda_.13} parent=61 // pred_check_branch
            %294 = sbr.rel (0) target = $region66
          $region65: #{_lambda_.13} parent=61 // pred_region
            // Predicated region
            $region67: #{_lambda_.13} parent=65 // pred_check
              _
            $region68: #{_lambda_.13} parent=65 // pred_check_branch
              %296 = sbr.rel (0) target = $region70
            $region69: #{_lambda_.13} parent=65 // pred_region
              // Predicated region
              $region82: #{_lambda_.13} parent=69 // pred_check
                _
              $region83: #{_lambda_.13} parent=69 // pred_check_branch
                %341 = sbr.rel (0) target = $region85
              $region84: #{_lambda_.13} parent=69 // pred_region
                loop: start=0, step=1, limit=1
                $region86: #{_lambda_.13} parent=84 // loop_pre_header
                  _
                $region87: #{_lambda_.13} parent=84 // loop_header
                  %s343 = sphi 0, %s347
                  %p344 = scmp.ge.s32.totalorder %s343, 1
                  %s348 = sphi %s292, %s292
                  %s349 = sphi %s287, %s287
                $region88: #{_lambda_.13} parent=84 // loop_header_branch
                  %346 = sbr.rel (%p344) target = $region92
                $region89: #{_lambda_.13} parent=84 // loop_body
                  %v350 = vld [vmem:[%s348] sm:$0xff]
                  %351 = vst [vmem:[%s349] sm:$0xff] %v350
                  %v352 = vld [vmem:[%s348 + $0x10] sm:$0xff]
                  %353 = vst [vmem:[%s349 + $0x8] sm:$0xff] %v352
                  %v354 = vld [vmem:[%s348 + $0x20] sm:$0xff]
                  %355 = vst [vmem:[%s349 + $0x10] sm:$0xff] %v354
                  %v356 = vld [vmem:[%s348 + $0x30] sm:$0xff]
                  %357 = vst [vmem:[%s349 + $0x18] sm:$0xff] %v356
                  %v358 = vld [vmem:[%s348 + $0x40] sm:$0xff]
                  %359 = vst [vmem:[%s349 + $0x20] sm:$0xff] %v358
                  %v360 = vld [vmem:[%s348 + $0x50] sm:$0xff]
                  %361 = vst [vmem:[%s349 + $0x28] sm:$0xff] %v360
                  %v362 = vld [vmem:[%s348 + $0x60] sm:$0xff]
                  %363 = vst [vmem:[%s349 + $0x30] sm:$0xff] %v362
                  %v364 = vld [vmem:[%s348 + $0x70] sm:$0xff]
                  %365 = vst [vmem:[%s349 + $0x38] sm:$0xff] %v364
                  %v366 = vld [vmem:[%s348 + $0x80] sm:$0xff]
                  %367 = vst [vmem:[%s349 + $0x40] sm:$0xff] %v366
                  %v368 = vld [vmem:[%s348 + $0x90] sm:$0xff]
                  %369 = vst [vmem:[%s349 + $0x48] sm:$0xff] %v368
                  %v370 = vld [vmem:[%s348 + $0xa0] sm:$0xff]
                  %371 = vst [vmem:[%s349 + $0x50] sm:$0xff] %v370
                  %v372 = vld [vmem:[%s348 + $0xb0] sm:$0xff]
                  %373 = vst [vmem:[%s349 + $0x58] sm:$0xff] %v372
                  %v374 = vld [vmem:[%s348 + $0xc0] sm:$0xff]
                  %375 = vst [vmem:[%s349 + $0x60] sm:$0xff] %v374
                  %v376 = vld [vmem:[%s348 + $0xd0] sm:$0xff]
                  %377 = vst [vmem:[%s349 + $0x68] sm:$0xff] %v376
                  %v378 = vld [vmem:[%s348 + $0xe0] sm:$0xff]
                  %379 = vst [vmem:[%s349 + $0x70] sm:$0xff] %v378
                  %v380 = vld [vmem:[%s348 + $0xf0] sm:$0xff]
                  %381 = vst [vmem:[%s349 + $0x78] sm:$0xff] %v380
                $region90: #{_lambda_.13} parent=84 // loop_footer
                  %s347 = sadd.s32 1, %s343
                $region91: #{_lambda_.13} parent=84 // loop_footer_branch
                  %342 = sbr.rel target = $region87
                $region92: #{_lambda_.13} parent=84 // loop_exit
                  _
              $region85: #{_lambda_.13} parent=69 // pred_fallthru
                _
              // Predicated region
              $region93: #{_lambda_.13} parent=69 // pred_check
                _
              $region94: #{_lambda_.13} parent=69 // pred_check_branch
                %383 = sbr.rel target = $region96
              $region95: #{_lambda_.13} parent=69 // pred_region
                _
              $region96: #{_lambda_.13} parent=69 // pred_fallthru
                _
            $region70: #{_lambda_.13} parent=65 // pred_fallthru
              _
            // Predicated region
            $region71: #{_lambda_.13} parent=65 // pred_check
              _
            $region72: #{_lambda_.13} parent=65 // pred_check_branch
              %298 = sbr.rel target = $region74
            $region73: #{_lambda_.13} parent=65 // pred_region
              loop: start=0, step=1, limit=1
              $region75: #{_lambda_.13} parent=73 // loop_pre_header
                _
              $region76: #{_lambda_.13} parent=73 // loop_header
                %s301 = sphi 0, %s305
                %p302 = scmp.ge.s32.totalorder %s301, 1
                %s306 = sphi %s292, %s292
                %s307 = sphi %s287, %s287
              $region77: #{_lambda_.13} parent=73 // loop_header_branch
                %304 = sbr.rel (%p302) target = $region81
              $region78: #{_lambda_.13} parent=73 // loop_body
                %v308 = vld [vmem:[%s306] sm:$0xff]
                %309 = vst [vmem:[%s307] sm:$0xff] %v308
                %v310 = vld [vmem:[%s306 + $0x10] sm:$0xff]
                %311 = vst [vmem:[%s307 + $0x8] sm:$0xff] %v310
                %v312 = vld [vmem:[%s306 + $0x20] sm:$0xff]
                %313 = vst [vmem:[%s307 + $0x10] sm:$0xff] %v312
                %v314 = vld [vmem:[%s306 + $0x30] sm:$0xff]
                %315 = vst [vmem:[%s307 + $0x18] sm:$0xff] %v314
                %v316 = vld [vmem:[%s306 + $0x40] sm:$0xff]
                %317 = vst [vmem:[%s307 + $0x20] sm:$0xff] %v316
                %v318 = vld [vmem:[%s306 + $0x50] sm:$0xff]
                %319 = vst [vmem:[%s307 + $0x28] sm:$0xff] %v318
                %v320 = vld [vmem:[%s306 + $0x60] sm:$0xff]
                %321 = vst [vmem:[%s307 + $0x30] sm:$0xff] %v320
                %v322 = vld [vmem:[%s306 + $0x70] sm:$0xff]
                %323 = vst [vmem:[%s307 + $0x38] sm:$0xff] %v322
                %v324 = vld [vmem:[%s306 + $0x80] sm:$0xff]
                %325 = vst [vmem:[%s307 + $0x40] sm:$0xff] %v324
                %v326 = vld [vmem:[%s306 + $0x90] sm:$0xff]
                %327 = vst [vmem:[%s307 + $0x48] sm:$0xff] %v326
                %v328 = vld [vmem:[%s306 + $0xa0] sm:$0xff]
                %329 = vst [vmem:[%s307 + $0x50] sm:$0xff] %v328
                %v330 = vld [vmem:[%s306 + $0xb0] sm:$0xff]
                %331 = vst [vmem:[%s307 + $0x58] sm:$0xff] %v330
                %v332 = vld [vmem:[%s306 + $0xc0] sm:$0xff]
                %333 = vst [vmem:[%s307 + $0x60] sm:$0xff] %v332
                %v334 = vld [vmem:[%s306 + $0xd0] sm:$0xff]
                %335 = vst [vmem:[%s307 + $0x68] sm:$0xff] %v334
                %v336 = vld [vmem:[%s306 + $0xe0] sm:$0xff]
                %337 = vst [vmem:[%s307 + $0x70] sm:$0xff] %v336
                %v338 = vld [vmem:[%s306 + $0xf0] sm:$0xff]
                %339 = vst [vmem:[%s307 + $0x78] sm:$0xff] %v338
              $region79: #{_lambda_.13} parent=73 // loop_footer
                %s305 = sadd.s32 1, %s301
              $region80: #{_lambda_.13} parent=73 // loop_footer_branch
                %300 = sbr.rel target = $region76
              $region81: #{_lambda_.13} parent=73 // loop_exit
                _
            $region74: #{_lambda_.13} parent=65 // pred_fallthru
              _
          $region66: #{_lambda_.13} parent=61 // pred_fallthru
            _
          %384 = vnop
        $region62: #{_lambda_.13} parent=15 // pred_fallthru
          _
      $region16: #{_lambda_.13} parent=5 // pred_fallthru
        _
      %p385 = scmp.le.s32.totalorder 1, %s9
      %p386 = scmp.lt.s32.totalorder %s9, 3
      %p387 = pnand %p385, %p386
      %p388 = pneg %p387
      // Predicated region
      $region97: #{_lambda_.13} parent=5 // pred_check
        _
      $region98: #{_lambda_.13} parent=5 // pred_check_branch
        %390 = sbr.rel (%p387) target = $region100
      $region99: #{_lambda_.13} parent=5 // pred_region
        %s391 = ssub.s32 %s9, 1
        %s392 = sand.u32 %s73, 1
        %s393 = sand.u32 %s73, 1
        %s394 = smul.addr %s393, 128
        %s395 = scalar_lea.vmem [#allocation3], %s394
        // Predicated region
        $region101: #{_lambda_.13} parent=99 // pred_check
          %p396 = pneg %p86
        $region102: #{_lambda_.13} parent=99 // pred_check_branch
          %398 = sbr.rel (%p396) target = $region104
        $region103: #{_lambda_.13} parent=99 // pred_region
          _
        $region104: #{_lambda_.13} parent=99 // pred_fallthru
          _
        %s399 = sand.u32 %s101, 1
        %s400 = sand.u32 %s101, 1
        %s401 = smul.addr %s400, 128
        %s402 = scalar_lea.vmem [#allocation4], %s401
        // Predicated region
        $region105: #{_lambda_.13} parent=99 // pred_check
          %p403 = pneg %p114
        $region106: #{_lambda_.13} parent=99 // pred_check_branch
          %405 = sbr.rel (%p403) target = $region108
        $region107: #{_lambda_.13} parent=99 // pred_region
          _
        $region108: #{_lambda_.13} parent=99 // pred_fallthru
          _
        %s406 = smul.u32 16, %s20
        %p407 = scmp.lt.s32.totalorder %s19, 1
        %s408 = scalar_select %p407, %s19, 1
        %p409 = scmp.lt.s32.totalorder %s406, 15
        %s410 = scalar_select %p409, %s406, 15
        %p411 = scmp.lt.s32.totalorder %s21, 0
        %s412 = scalar_select %p411, %s21, 0
        %s413 = sadd.s32 %s412, %s410
        %s414 = smul.addr %s408, 16
        %s415 = sadd.s32 %s413, %s414
        %s416 = smul.addr %s415, 4
        %s417 = scalar_lea.vmem %s0, %s416
        %p418 = pneg %p58
        %p419 = pneg %p55
        %s420 = sand.u32 %s73, 1
        %s421 = sand.u32 %s73, 1
        %s422 = smul.addr %s421, 128
        %s423 = scalar_lea.vmem [#allocation3], %s422
        %p424 = pneg %p86
        %p425 = pneg %p83
        %s426 = sand.u32 %s101, 1
        %s427 = sand.u32 %s101, 1
        %s428 = smul.addr %s427, 128
        %s429 = scalar_lea.vmem [#allocation4], %s428
        %p430 = pneg %p114
        %p431 = pneg %p111
        %p432 = pneg %p142
        %p433 = pneg %p139
        %s434 = sand.u32 %s129, 1
        %s435 = sand.u32 %s129, 1
        %s436 = smul.addr %s435, 128
        %s437 = scalar_lea.vmem [#allocation5], %s436
        %s438 = smul.u32 16, %s20
        %p439 = scmp.lt.s32.totalorder %s19, 1
        %s440 = scalar_select %p439, %s19, 1
        %p441 = scmp.lt.s32.totalorder %s438, 15
        %s442 = scalar_select %p441, %s438, 15
        %p443 = scmp.lt.s32.totalorder %s21, 0
        %s444 = scalar_select %p443, %s21, 0
        %s445 = sadd.s32 %s444, %s442
        %s446 = smul.addr %s440, 16
        %s447 = sadd.s32 %s445, %s446
        %s448 = smul.addr %s447, 4
        %s449 = scalar_lea.vmem %s0, %s448
        %s450 = smul.u32 16, %s20
        %s451 = smul.u32 16, %s21
        %s452 = smul.u32 16, %s20
        %s453 = smul.u32 16, %s20
        %p455 = scmp.eq.s32.totalorder %s21, 0
        // Predicated region
        $region109: #{_lambda_.13} parent=99 // pred_check
          %p456 = pneg %p455
        $region110: #{_lambda_.13} parent=99 // pred_check_branch
          %458 = sbr.rel (%p456) target = $region112
        $region111: #{_lambda_.13} parent=99 // pred_region
          %459 = vst [vmem:[#allocation2] sm:$0xff] 0.0
          %460 = vst [vmem:[#allocation2 + $0x8] sm:$0xff] 0.0
          %461 = vst [vmem:[#allocation2 + $0x10] sm:$0xff] 0.0
          %462 = vst [vmem:[#allocation2 + $0x18] sm:$0xff] 0.0
          %463 = vst [vmem:[#allocation2 + $0x20] sm:$0xff] 0.0
          %464 = vst [vmem:[#allocation2 + $0x28] sm:$0xff] 0.0
          %465 = vst [vmem:[#allocation2 + $0x30] sm:$0xff] 0.0
          %466 = vst [vmem:[#allocation2 + $0x38] sm:$0xff] 0.0
          %467 = vst [vmem:[#allocation2 + $0x40] sm:$0xff] 0.0
          %468 = vst [vmem:[#allocation2 + $0x48] sm:$0xff] 0.0
          %469 = vst [vmem:[#allocation2 + $0x50] sm:$0xff] 0.0
          %470 = vst [vmem:[#allocation2 + $0x58] sm:$0xff] 0.0
          %471 = vst [vmem:[#allocation2 + $0x60] sm:$0xff] 0.0
          %472 = vst [vmem:[#allocation2 + $0x68] sm:$0xff] 0.0
          %473 = vst [vmem:[#allocation2 + $0x70] sm:$0xff] 0.0
          %474 = vst [vmem:[#allocation2 + $0x78] sm:$0xff] 0.0
        $region112: #{_lambda_.13} parent=99 // pred_fallthru
          _
        %v475 = vld [vmem:[#allocation2] sm:$0xff]
        %v476 = vld [vmem:[#allocation2 + $0x8] sm:$0xff]
        %v477 = vld [vmem:[#allocation2 + $0x10] sm:$0xff]
        %v478 = vld [vmem:[#allocation2 + $0x18] sm:$0xff]
        %v479 = vld [vmem:[#allocation2 + $0x20] sm:$0xff]
        %v480 = vld [vmem:[#allocation2 + $0x28] sm:$0xff]
        %v481 = vld [vmem:[#allocation2 + $0x30] sm:$0xff]
        %v482 = vld [vmem:[#allocation2 + $0x38] sm:$0xff]
        %v483 = vld [vmem:[#allocation2 + $0x40] sm:$0xff]
        %v484 = vld [vmem:[#allocation2 + $0x48] sm:$0xff]
        %v485 = vld [vmem:[#allocation2 + $0x50] sm:$0xff]
        %v486 = vld [vmem:[#allocation2 + $0x58] sm:$0xff]
        %v487 = vld [vmem:[#allocation2 + $0x60] sm:$0xff]
        %v488 = vld [vmem:[#allocation2 + $0x68] sm:$0xff]
        %v489 = vld [vmem:[#allocation2 + $0x70] sm:$0xff]
        %v490 = vld [vmem:[#allocation2 + $0x78] sm:$0xff]
        %v491 = vld [vmem:[%s449] sm:$0xf]
        %v492 = vld [vmem:[%s449 + $0x4] sm:$0xf]
        %v493 = vld [vmem:[%s449 + $0x8] sm:$0xf]
        %v494 = vld [vmem:[%s449 + $0xc] sm:$0xf]
        %v495 = vld [vmem:[%s449 + $0x10] sm:$0xf]
        %v496 = vld [vmem:[%s449 + $0x14] sm:$0xf]
        %v497 = vld [vmem:[%s449 + $0x18] sm:$0xf]
        %v498 = vld [vmem:[%s449 + $0x1c] sm:$0xf]
        %v499 = vld [vmem:[%s449 + $0x20] sm:$0xf]
        %v500 = vld [vmem:[%s449 + $0x24] sm:$0xf]
        %v501 = vld [vmem:[%s449 + $0x28] sm:$0xf]
        %v502 = vld [vmem:[%s449 + $0x2c] sm:$0xf]
        %v503 = vld [vmem:[%s449 + $0x30] sm:$0xf]
        %v504 = vld [vmem:[%s449 + $0x34] sm:$0xf]
        %v505 = vld [vmem:[%s449 + $0x38] sm:$0xf]
        %v506 = vld [vmem:[%s449 + $0x3c] sm:$0xf]
        %v507 = vld [vmem:[%s395] sm:$0xff]
        %v508 = vld [vmem:[%s395 + $0x8] sm:$0xff]
        %v509 = vld [vmem:[%s395 + $0x10] sm:$0xff]
        %v510 = vld [vmem:[%s395 + $0x18] sm:$0xff]
        %v511 = vld [vmem:[%s395 + $0x20] sm:$0xff]
        %v512 = vld [vmem:[%s395 + $0x28] sm:$0xff]
        %v513 = vld [vmem:[%s395 + $0x30] sm:$0xff]
        %v514 = vld [vmem:[%s395 + $0x38] sm:$0xff]
        %v515 = vld [vmem:[%s395 + $0x40] sm:$0xff]
        %v516 = vld [vmem:[%s395 + $0x48] sm:$0xff]
        %v517 = vld [vmem:[%s395 + $0x50] sm:$0xff]
        %v518 = vld [vmem:[%s395 + $0x58] sm:$0xff]
        %v519 = vld [vmem:[%s395 + $0x60] sm:$0xff]
        %v520 = vld [vmem:[%s395 + $0x68] sm:$0xff]
        %v521 = vld [vmem:[%s395 + $0x70] sm:$0xff]
        %v522 = vld [vmem:[%s395 + $0x78] sm:$0xff]
        %v523 = vpack.c.bf16 %v508, %v507
        %v524 = vpack.c.bf16 %v510, %v509
        %v525 = vpack.c.bf16 %v512, %v511
        %v526 = vpack.c.bf16 %v514, %v513
        %v527 = vpack.c.bf16 %v516, %v515
        %v528 = vpack.c.bf16 %v518, %v517
        %v529 = vpack.c.bf16 %v520, %v519
        %v530 = vpack.c.bf16 %v522, %v521
        %v547 = vunpack.c.l.b16 %v491
        %v548 = vunpack.c.l.b16 %v492
        %v549 = vunpack.c.l.b16 %v493
        %v550 = vunpack.c.l.b16 %v494
        %v551 = vunpack.c.l.b16 %v495
        %v552 = vunpack.c.l.b16 %v496
        %v553 = vunpack.c.l.b16 %v497
        %v554 = vunpack.c.l.b16 %v498
        %v555 = vunpack.c.l.b16 %v499
        %v556 = vunpack.c.l.b16 %v500
        %v557 = vunpack.c.l.b16 %v501
        %v558 = vunpack.c.l.b16 %v502
        %v559 = vunpack.c.l.b16 %v503
        %v560 = vunpack.c.l.b16 %v504
        %v561 = vunpack.c.l.b16 %v505
        %v562 = vunpack.c.l.b16 %v506
        %v563 = vpack.c.b16 %v548, %v547
        %v564 = vpack.c.b16 %v550, %v549
        %v565 = vpack.c.b16 %v552, %v551
        %v566 = vpack.c.b16 %v554, %v553
        %v567 = vpack.c.b16 %v556, %v555
        %v568 = vpack.c.b16 %v558, %v557
        %v569 = vpack.c.b16 %v560, %v559
        %v570 = vpack.c.b16 %v562, %v561
        %579 = vmatprep.subr.bf16.mxu0 0
        %580 = vmatpush1.bf16.msra.mxu0 %v523
        %581 = vmatprep.subr.bf16.mxu0 0
        %582 = vmatpush1.bf16.msra.mxu0 %v524
        %583 = vmatprep.subr.bf16.mxu0 0
        %584 = vmatpush1.bf16.msra.mxu0 %v525
        %585 = vmatprep.subr.bf16.mxu0 0
        %586 = vmatpush1.bf16.msra.mxu0 %v526
        %587 = vmatprep.subr.bf16.mxu0 0
        %588 = vmatpush1.bf16.msra.mxu0 %v527
        %589 = vmatprep.subr.bf16.mxu0 0
        %590 = vmatpush1.bf16.msra.mxu0 %v528
        %591 = vmatprep.subr.bf16.mxu0 0
        %592 = vmatpush1.bf16.msra.mxu0 %v529
        %593 = vmatprep.subr.bf16.mxu0 0
        %594 = vmatpush1.bf16.msra.mxu0 %v530
        %595 = vmatprep.subr.bf16.mxu0 0
        %596 = vmatpush1.bf16.msra.mxu0 0
        %597 = vmatprep.subr.bf16.mxu0 0
        %598 = vmatpush1.bf16.msra.mxu0 0
        %599 = vmatprep.subr.bf16.mxu0 0
        %600 = vmatpush1.bf16.msra.mxu0 0
        %601 = vmatprep.subr.bf16.mxu0 0
        %602 = vmatpush1.bf16.msra.mxu0 0
        %603 = vmatprep.subr.bf16.mxu0 0
        %604 = vmatpush1.bf16.msra.mxu0 0
        %605 = vmatprep.subr.bf16.mxu0 0
        %606 = vmatpush1.bf16.msra.mxu0 0
        %607 = vmatprep.subr.bf16.mxu0 0
        %608 = vmatpush1.bf16.msra.mxu0 0
        %609 = vmatprep.subr.bf16.mxu0 0
        %610 = vmatpush1.bf16.msra.mxu0 0
        %611 = vmatprep.mubr.bf16.mxu0 0
        %612 = vmatmul.mubr.bf16.gmra.mrb[0].mxu0 %v563
        %v613 = vpop.f32.mrb[0].mxu0
        %v614 = vadd.f32 0.0, %v613
        %v615 = vpop.f32.mrb[0].mxu0
        %v616 = vpop.f32.mrb[0].mxu0
        %v617 = vadd.f32 0.0, %v616
        %v618 = vpop.f32.mrb[0].mxu0
        %619 = vmatprep.mubr.bf16.mxu0 0
        %620 = vmatmul.mubr.bf16.gmra.mrb[0].mxu0 %v564
        %v621 = vpop.f32.mrb[0].mxu0
        %v622 = vadd.f32 0.0, %v621
        %v623 = vpop.f32.mrb[0].mxu0
        %v624 = vpop.f32.mrb[0].mxu0
        %v625 = vadd.f32 0.0, %v624
        %v626 = vpop.f32.mrb[0].mxu0
        %627 = vmatprep.mubr.bf16.mxu0 0
        %628 = vmatmul.mubr.bf16.gmra.mrb[0].mxu0 %v565
        %v629 = vpop.f32.mrb[0].mxu0
        %v630 = vadd.f32 0.0, %v629
        %v631 = vpop.f32.mrb[0].mxu0
        %v632 = vpop.f32.mrb[0].mxu0
        %v633 = vadd.f32 0.0, %v632
        %v634 = vpop.f32.mrb[0].mxu0
        %635 = vmatprep.mubr.bf16.mxu0 0
        %636 = vmatmul.mubr.bf16.gmra.mrb[0].mxu0 %v566
        %v637 = vpop.f32.mrb[0].mxu0
        %v638 = vadd.f32 0.0, %v637
        %v639 = vpop.f32.mrb[0].mxu0
        %v640 = vpop.f32.mrb[0].mxu0
        %v641 = vadd.f32 0.0, %v640
        %v642 = vpop.f32.mrb[0].mxu0
        %643 = vmatprep.mubr.bf16.mxu0 0
        %644 = vmatmul.mubr.bf16.gmra.mrb[0].mxu0 %v567
        %v645 = vpop.f32.mrb[0].mxu0
        %v646 = vadd.f32 0.0, %v645
        %v647 = vpop.f32.mrb[0].mxu0
        %v648 = vpop.f32.mrb[0].mxu0
        %v649 = vadd.f32 0.0, %v648
        %v650 = vpop.f32.mrb[0].mxu0
        %651 = vmatprep.mubr.bf16.mxu0 0
        %652 = vmatmul.mubr.bf16.gmra.mrb[0].mxu0 %v568
        %v653 = vpop.f32.mrb[0].mxu0
        %v654 = vadd.f32 0.0, %v653
        %v655 = vpop.f32.mrb[0].mxu0
        %v656 = vpop.f32.mrb[0].mxu0
        %v657 = vadd.f32 0.0, %v656
        %v658 = vpop.f32.mrb[0].mxu0
        %659 = vmatprep.mubr.bf16.mxu0 0
        %660 = vmatmul.mubr.bf16.gmra.mrb[0].mxu0 %v569
        %v661 = vpop.f32.mrb[0].mxu0
        %v662 = vadd.f32 0.0, %v661
        %v663 = vpop.f32.mrb[0].mxu0
        %v664 = vpop.f32.mrb[0].mxu0
        %v665 = vadd.f32 0.0, %v664
        %v666 = vpop.f32.mrb[0].mxu0
        %667 = vmatprep.mubr.bf16.mxu0 0
        %668 = vmatmul.mubr.bf16.gmra.mrb[0].mxu0 %v570
        %v669 = vpop.f32.mrb[0].mxu0
        %v670 = vadd.f32 0.0, %v669
        %v671 = vpop.f32.mrb[0].mxu0
        %v672 = vpop.f32.mrb[0].mxu0
        %v673 = vadd.f32 0.0, %v672
        %v674 = vpop.f32.mrb[0].mxu0
        %675 = vdwg.mxu0
        %v676 = vadd.f32 %v475, %v614
        %v677 = vadd.f32 %v476, %v617
        %v678 = vadd.f32 %v477, %v622
        %v679 = vadd.f32 %v478, %v625
        %v680 = vadd.f32 %v479, %v630
        %v681 = vadd.f32 %v480, %v633
        %v682 = vadd.f32 %v481, %v638
        %v683 = vadd.f32 %v482, %v641
        %v684 = vadd.f32 %v483, %v646
        %v685 = vadd.f32 %v484, %v649
        %v686 = vadd.f32 %v485, %v654
        %v687 = vadd.f32 %v486, %v657
        %v688 = vadd.f32 %v487, %v662
        %v689 = vadd.f32 %v488, %v665
        %v690 = vadd.f32 %v489, %v670
        %v691 = vadd.f32 %v490, %v673
        %692 = vst [vmem:[#allocation2] sm:$0xff] %v676
        %693 = vst [vmem:[#allocation2 + $0x8] sm:$0xff] %v677
        %694 = vst [vmem:[#allocation2 + $0x10] sm:$0xff] %v678
        %695 = vst [vmem:[#allocation2 + $0x18] sm:$0xff] %v679
        %696 = vst [vmem:[#allocation2 + $0x20] sm:$0xff] %v680
        %697 = vst [vmem:[#allocation2 + $0x28] sm:$0xff] %v681
        %698 = vst [vmem:[#allocation2 + $0x30] sm:$0xff] %v682
        %699 = vst [vmem:[#allocation2 + $0x38] sm:$0xff] %v683
        %700 = vst [vmem:[#allocation2 + $0x40] sm:$0xff] %v684
        %701 = vst [vmem:[#allocation2 + $0x48] sm:$0xff] %v685
        %702 = vst [vmem:[#allocation2 + $0x50] sm:$0xff] %v686
        %703 = vst [vmem:[#allocation2 + $0x58] sm:$0xff] %v687
        %704 = vst [vmem:[#allocation2 + $0x60] sm:$0xff] %v688
        %705 = vst [vmem:[#allocation2 + $0x68] sm:$0xff] %v689
        %706 = vst [vmem:[#allocation2 + $0x70] sm:$0xff] %v690
        %707 = vst [vmem:[#allocation2 + $0x78] sm:$0xff] %v691
        // Predicated region
        $region113: #{_lambda_.13} parent=99 // pred_check
          %p708 = pneg %p455
        $region114: #{_lambda_.13} parent=99 // pred_check_branch
          %710 = sbr.rel (%p708) target = $region116
        $region115: #{_lambda_.13} parent=99 // pred_region
          %v711 = vld [vmem:[%s402] sm:$0xff]
          %v712 = vld [vmem:[%s402 + $0x8] sm:$0xff]
          %v713 = vld [vmem:[%s402 + $0x10] sm:$0xff]
          %v714 = vld [vmem:[%s402 + $0x18] sm:$0xff]
          %v715 = vld [vmem:[%s402 + $0x20] sm:$0xff]
          %v716 = vld [vmem:[%s402 + $0x28] sm:$0xff]
          %v717 = vld [vmem:[%s402 + $0x30] sm:$0xff]
          %v718 = vld [vmem:[%s402 + $0x38] sm:$0xff]
          %v719 = vld [vmem:[%s402 + $0x40] sm:$0xff]
          %v720 = vld [vmem:[%s402 + $0x48] sm:$0xff]
          %v721 = vld [vmem:[%s402 + $0x50] sm:$0xff]
          %v722 = vld [vmem:[%s402 + $0x58] sm:$0xff]
          %v723 = vld [vmem:[%s402 + $0x60] sm:$0xff]
          %v724 = vld [vmem:[%s402 + $0x68] sm:$0xff]
          %v725 = vld [vmem:[%s402 + $0x70] sm:$0xff]
          %v726 = vld [vmem:[%s402 + $0x78] sm:$0xff]
          %v727 = vmul.f32 %v711, 0.15
          %v728 = vmul.f32 %v712, 0.15
          %v729 = vmul.f32 %v713, 0.15
          %v730 = vmul.f32 %v714, 0.15
          %v731 = vmul.f32 %v715, 0.15
          %v732 = vmul.f32 %v716, 0.15
          %v733 = vmul.f32 %v717, 0.15
          %v734 = vmul.f32 %v718, 0.15
          %v735 = vmul.f32 %v719, 0.15
          %v736 = vmul.f32 %v720, 0.15
          %v737 = vmul.f32 %v721, 0.15
          %v738 = vmul.f32 %v722, 0.15
          %v739 = vmul.f32 %v723, 0.15
          %v740 = vmul.f32 %v724, 0.15
          %v741 = vmul.f32 %v725, 0.15
          %v742 = vmul.f32 %v726, 0.15
          %v743 = vld [vmem:[#allocation2] sm:$0xff]
          %v744 = vld [vmem:[#allocation2 + $0x8] sm:$0xff]
          %v745 = vld [vmem:[#allocation2 + $0x10] sm:$0xff]
          %v746 = vld [vmem:[#allocation2 + $0x18] sm:$0xff]
          %v747 = vld [vmem:[#allocation2 + $0x20] sm:$0xff]
          %v748 = vld [vmem:[#allocation2 + $0x28] sm:$0xff]
          %v749 = vld [vmem:[#allocation2 + $0x30] sm:$0xff]
          %v750 = vld [vmem:[#allocation2 + $0x38] sm:$0xff]
          %v751 = vld [vmem:[#allocation2 + $0x40] sm:$0xff]
          %v752 = vld [vmem:[#allocation2 + $0x48] sm:$0xff]
          %v753 = vld [vmem:[#allocation2 + $0x50] sm:$0xff]
          %v754 = vld [vmem:[#allocation2 + $0x58] sm:$0xff]
          %v755 = vld [vmem:[#allocation2 + $0x60] sm:$0xff]
          %v756 = vld [vmem:[#allocation2 + $0x68] sm:$0xff]
          %v757 = vld [vmem:[#allocation2 + $0x70] sm:$0xff]
          %v758 = vld [vmem:[#allocation2 + $0x78] sm:$0xff]
          %v759 = vmul.f32 %v743, 0.85
          %v760 = vmul.f32 %v744, 0.85
          %v761 = vmul.f32 %v745, 0.85
          %v762 = vmul.f32 %v746, 0.85
          %v763 = vmul.f32 %v747, 0.85
          %v764 = vmul.f32 %v748, 0.85
          %v765 = vmul.f32 %v749, 0.85
          %v766 = vmul.f32 %v750, 0.85
          %v767 = vmul.f32 %v751, 0.85
          %v768 = vmul.f32 %v752, 0.85
          %v769 = vmul.f32 %v753, 0.85
          %v770 = vmul.f32 %v754, 0.85
          %v771 = vmul.f32 %v755, 0.85
          %v772 = vmul.f32 %v756, 0.85
          %v773 = vmul.f32 %v757, 0.85
          %v774 = vmul.f32 %v758, 0.85
          %v775 = vadd.f32 %v727, %v759
          %v776 = vadd.f32 %v728, %v760
          %v777 = vadd.f32 %v729, %v761
          %v778 = vadd.f32 %v730, %v762
          %v779 = vadd.f32 %v731, %v763
          %v780 = vadd.f32 %v732, %v764
          %v781 = vadd.f32 %v733, %v765
          %v782 = vadd.f32 %v734, %v766
          %v783 = vadd.f32 %v735, %v767
          %v784 = vadd.f32 %v736, %v768
          %v785 = vadd.f32 %v737, %v769
          %v786 = vadd.f32 %v738, %v770
          %v787 = vadd.f32 %v739, %v771
          %v788 = vadd.f32 %v740, %v772
          %v789 = vadd.f32 %v741, %v773
          %v790 = vadd.f32 %v742, %v774
          %791 = vst [vmem:[%s437] sm:$0xff] %v775
          %792 = vst [vmem:[%s437 + $0x8] sm:$0xff] %v776
          %793 = vst [vmem:[%s437 + $0x10] sm:$0xff] %v777
          %794 = vst [vmem:[%s437 + $0x18] sm:$0xff] %v778
          %795 = vst [vmem:[%s437 + $0x20] sm:$0xff] %v779
          %796 = vst [vmem:[%s437 + $0x28] sm:$0xff] %v780
          %797 = vst [vmem:[%s437 + $0x30] sm:$0xff] %v781
          %798 = vst [vmem:[%s437 + $0x38] sm:$0xff] %v782
          %799 = vst [vmem:[%s437 + $0x40] sm:$0xff] %v783
          %800 = vst [vmem:[%s437 + $0x48] sm:$0xff] %v784
          %801 = vst [vmem:[%s437 + $0x50] sm:$0xff] %v785
          %802 = vst [vmem:[%s437 + $0x58] sm:$0xff] %v786
          %803 = vst [vmem:[%s437 + $0x60] sm:$0xff] %v787
          %804 = vst [vmem:[%s437 + $0x68] sm:$0xff] %v788
          %805 = vst [vmem:[%s437 + $0x70] sm:$0xff] %v789
          %806 = vst [vmem:[%s437 + $0x78] sm:$0xff] %v790
        $region116: #{_lambda_.13} parent=99 // pred_fallthru
          _
        %s807 = sand.u32 %s129, 1
        %s808 = sand.u32 %s129, 1
        %s809 = smul.addr %s808, 128
        %s810 = scalar_lea.vmem [#allocation5], %s809
        // Predicated region
        $region117: #{_lambda_.13} parent=99 // pred_check
          %p811 = pneg %p139
        $region118: #{_lambda_.13} parent=99 // pred_check_branch
          %813 = sbr.rel (%p811) target = $region120
        $region119: #{_lambda_.13} parent=99 // pred_region
          %s814 = smul.u32 16, %s20
          %s815 = smul.addr %s814, 2
          %s816 = sadd.s32 %s19, %s815
          %s817 = smul.addr %s816, 8
          %s818 = scalar_lea.vmem %s3, %s817
          // Predicated region
          $region121: #{_lambda_.13} parent=119 // pred_check
            _
          $region122: #{_lambda_.13} parent=119 // pred_check_branch
            %820 = sbr.rel (0) target = $region124
          $region123: #{_lambda_.13} parent=119 // pred_region
            // Predicated region
            $region125: #{_lambda_.13} parent=123 // pred_check
              _
            $region126: #{_lambda_.13} parent=123 // pred_check_branch
              %822 = sbr.rel (0) target = $region128
            $region127: #{_lambda_.13} parent=123 // pred_region
              // Predicated region
              $region140: #{_lambda_.13} parent=127 // pred_check
                _
              $region141: #{_lambda_.13} parent=127 // pred_check_branch
                %867 = sbr.rel (0) target = $region143
              $region142: #{_lambda_.13} parent=127 // pred_region
                loop: start=0, step=1, limit=1
                $region144: #{_lambda_.13} parent=142 // loop_pre_header
                  _
                $region145: #{_lambda_.13} parent=142 // loop_header
                  %s869 = sphi 0, %s873
                  %p870 = scmp.ge.s32.totalorder %s869, 1
                  %s874 = sphi %s810, %s810
                  %s875 = sphi %s818, %s818
                $region146: #{_lambda_.13} parent=142 // loop_header_branch
                  %872 = sbr.rel (%p870) target = $region150
                $region147: #{_lambda_.13} parent=142 // loop_body
                  %v876 = vld [vmem:[%s874] sm:$0xff]
                  %877 = vst [vmem:[%s875] sm:$0xff] %v876
                  %v878 = vld [vmem:[%s874 + $0x8] sm:$0xff]
                  %879 = vst [vmem:[%s875 + $0x10] sm:$0xff] %v878
                  %v880 = vld [vmem:[%s874 + $0x10] sm:$0xff]
                  %881 = vst [vmem:[%s875 + $0x20] sm:$0xff] %v880
                  %v882 = vld [vmem:[%s874 + $0x18] sm:$0xff]
                  %883 = vst [vmem:[%s875 + $0x30] sm:$0xff] %v882
                  %v884 = vld [vmem:[%s874 + $0x20] sm:$0xff]
                  %885 = vst [vmem:[%s875 + $0x40] sm:$0xff] %v884
                  %v886 = vld [vmem:[%s874 + $0x28] sm:$0xff]
                  %887 = vst [vmem:[%s875 + $0x50] sm:$0xff] %v886
                  %v888 = vld [vmem:[%s874 + $0x30] sm:$0xff]
                  %889 = vst [vmem:[%s875 + $0x60] sm:$0xff] %v888
                  %v890 = vld [vmem:[%s874 + $0x38] sm:$0xff]
                  %891 = vst [vmem:[%s875 + $0x70] sm:$0xff] %v890
                  %v892 = vld [vmem:[%s874 + $0x40] sm:$0xff]
                  %893 = vst [vmem:[%s875 + $0x80] sm:$0xff] %v892
                  %v894 = vld [vmem:[%s874 + $0x48] sm:$0xff]
                  %895 = vst [vmem:[%s875 + $0x90] sm:$0xff] %v894
                  %v896 = vld [vmem:[%s874 + $0x50] sm:$0xff]
                  %897 = vst [vmem:[%s875 + $0xa0] sm:$0xff] %v896
                  %v898 = vld [vmem:[%s874 + $0x58] sm:$0xff]
                  %899 = vst [vmem:[%s875 + $0xb0] sm:$0xff] %v898
                  %v900 = vld [vmem:[%s874 + $0x60] sm:$0xff]
                  %901 = vst [vmem:[%s875 + $0xc0] sm:$0xff] %v900
                  %v902 = vld [vmem:[%s874 + $0x68] sm:$0xff]
                  %903 = vst [vmem:[%s875 + $0xd0] sm:$0xff] %v902
                  %v904 = vld [vmem:[%s874 + $0x70] sm:$0xff]
                  %905 = vst [vmem:[%s875 + $0xe0] sm:$0xff] %v904
                  %v906 = vld [vmem:[%s874 + $0x78] sm:$0xff]
                  %907 = vst [vmem:[%s875 + $0xf0] sm:$0xff] %v906
                $region148: #{_lambda_.13} parent=142 // loop_footer
                  %s873 = sadd.s32 1, %s869
                $region149: #{_lambda_.13} parent=142 // loop_footer_branch
                  %868 = sbr.rel target = $region145
                $region150: #{_lambda_.13} parent=142 // loop_exit
                  _
              $region143: #{_lambda_.13} parent=127 // pred_fallthru
                _
              // Predicated region
              $region151: #{_lambda_.13} parent=127 // pred_check
                _
              $region152: #{_lambda_.13} parent=127 // pred_check_branch
                %909 = sbr.rel target = $region154
              $region153: #{_lambda_.13} parent=127 // pred_region
                _
              $region154: #{_lambda_.13} parent=127 // pred_fallthru
                _
            $region128: #{_lambda_.13} parent=123 // pred_fallthru
              _
            // Predicated region
            $region129: #{_lambda_.13} parent=123 // pred_check
              _
            $region130: #{_lambda_.13} parent=123 // pred_check_branch
              %824 = sbr.rel target = $region132
            $region131: #{_lambda_.13} parent=123 // pred_region
              loop: start=0, step=1, limit=1
              $region133: #{_lambda_.13} parent=131 // loop_pre_header
                _
              $region134: #{_lambda_.13} parent=131 // loop_header
                %s827 = sphi 0, %s831
                %p828 = scmp.ge.s32.totalorder %s827, 1
                %s832 = sphi %s810, %s810
                %s833 = sphi %s818, %s818
              $region135: #{_lambda_.13} parent=131 // loop_header_branch
                %830 = sbr.rel (%p828) target = $region139
              $region136: #{_lambda_.13} parent=131 // loop_body
                %v834 = vld [vmem:[%s832] sm:$0xff]
                %835 = vst [vmem:[%s833] sm:$0xff] %v834
                %v836 = vld [vmem:[%s832 + $0x8] sm:$0xff]
                %837 = vst [vmem:[%s833 + $0x10] sm:$0xff] %v836
                %v838 = vld [vmem:[%s832 + $0x10] sm:$0xff]
                %839 = vst [vmem:[%s833 + $0x20] sm:$0xff] %v838
                %v840 = vld [vmem:[%s832 + $0x18] sm:$0xff]
                %841 = vst [vmem:[%s833 + $0x30] sm:$0xff] %v840
                %v842 = vld [vmem:[%s832 + $0x20] sm:$0xff]
                %843 = vst [vmem:[%s833 + $0x40] sm:$0xff] %v842
                %v844 = vld [vmem:[%s832 + $0x28] sm:$0xff]
                %845 = vst [vmem:[%s833 + $0x50] sm:$0xff] %v844
                %v846 = vld [vmem:[%s832 + $0x30] sm:$0xff]
                %847 = vst [vmem:[%s833 + $0x60] sm:$0xff] %v846
                %v848 = vld [vmem:[%s832 + $0x38] sm:$0xff]
                %849 = vst [vmem:[%s833 + $0x70] sm:$0xff] %v848
                %v850 = vld [vmem:[%s832 + $0x40] sm:$0xff]
                %851 = vst [vmem:[%s833 + $0x80] sm:$0xff] %v850
                %v852 = vld [vmem:[%s832 + $0x48] sm:$0xff]
                %853 = vst [vmem:[%s833 + $0x90] sm:$0xff] %v852
                %v854 = vld [vmem:[%s832 + $0x50] sm:$0xff]
                %855 = vst [vmem:[%s833 + $0xa0] sm:$0xff] %v854
                %v856 = vld [vmem:[%s832 + $0x58] sm:$0xff]
                %857 = vst [vmem:[%s833 + $0xb0] sm:$0xff] %v856
                %v858 = vld [vmem:[%s832 + $0x60] sm:$0xff]
                %859 = vst [vmem:[%s833 + $0xc0] sm:$0xff] %v858
                %v860 = vld [vmem:[%s832 + $0x68] sm:$0xff]
                %861 = vst [vmem:[%s833 + $0xd0] sm:$0xff] %v860
                %v862 = vld [vmem:[%s832 + $0x70] sm:$0xff]
                %863 = vst [vmem:[%s833 + $0xe0] sm:$0xff] %v862
                %v864 = vld [vmem:[%s832 + $0x78] sm:$0xff]
                %865 = vst [vmem:[%s833 + $0xf0] sm:$0xff] %v864
              $region137: #{_lambda_.13} parent=131 // loop_footer
                %s831 = sadd.s32 1, %s827
              $region138: #{_lambda_.13} parent=131 // loop_footer_branch
                %826 = sbr.rel target = $region134
              $region139: #{_lambda_.13} parent=131 // loop_exit
                _
            $region132: #{_lambda_.13} parent=123 // pred_fallthru
              _
          $region124: #{_lambda_.13} parent=119 // pred_fallthru
            _
          %910 = vnop
        $region120: #{_lambda_.13} parent=99 // pred_fallthru
          _
      $region100: #{_lambda_.13} parent=5 // pred_fallthru
        _
      %p911 = scmp.le.s32.totalorder 2, %s9
      // Predicated region
      $region155: #{_lambda_.13} parent=5 // pred_check
        %p912 = pneg %p911
      $region156: #{_lambda_.13} parent=5 // pred_check_branch
        %914 = sbr.rel (%p912) target = $region158
      $region157: #{_lambda_.13} parent=5 // pred_region
        %s915 = ssub.s32 %s9, 2
        // Predicated region
        $region159: #{_lambda_.13} parent=157 // pred_check
          %p916 = pneg %p145
        $region160: #{_lambda_.13} parent=157 // pred_check_branch
          %918 = sbr.rel (%p916) target = $region162
        $region161: #{_lambda_.13} parent=157 // pred_region
          %s919 = sand.u32 %s130, 1
          %s920 = sand.u32 %s130, 1
          %s921 = smul.addr %s920, 128
          %s922 = scalar_lea.vmem [#allocation5], %s921
        $region162: #{_lambda_.13} parent=157 // pred_fallthru
          _
      $region158: #{_lambda_.13} parent=5 // pred_fallthru
        _
    $region6: #{_lambda_.13} parent=1 // loop_footer
      %s13 = sadd.s32 1, %s9
    $region7: #{_lambda_.13} parent=1 // loop_footer_branch
      %8 = sbr.rel target = $region3
    $region8: #{_lambda_.13} parent=1 // loop_exit
      _

// kernel: _lambda_.12
$region0: #{_lambda_.12}
  #allocation0 [shape = 'u32[]', space=smem, size = 0x4, offset = 0x4, fixed_abs, tag = 'smem constant byte address 0x4 - core index']
  #allocation1 [shape = 'u32[144,128]{1,0:T(1,128)}', space=vmem, size = 0x12000, scoped, tag = 'internal scratch']
  %s0 = inlined_call_operand.vmem [shape: f32[2,128,1], index: 0, kind: input, shape index: {}]
  %s1 = inlined_call_operand.vmem [shape: f32[2,1,128], index: 1, kind: input, shape index: {}]
  %s2 = inlined_call_operand.vmem [shape: bf16[128,128], index: 2, kind: input, shape index: {}]
  %s3 = inlined_call_operand.vmem [shape: bf16[2,128,128], index: 3, kind: output, shape index: {}]
  %s4 = sld [smem:[#allocation0]]
  $region45: #{_lambda_.12} parent=0
    _
  %s6 = ssub.s32 1, %s4
  %s7 = scalar_select 0, %s6, %s4
  loop: start=0, step=1, limit=4
  $region2: #{_lambda_.12} parent=0 // loop_pre_header
    _
  $region3: #{_lambda_.12} parent=0 // loop_header
    %s9 = sphi 0, %s13
    %p10 = scmp.ge.s32.totalorder %s9, 4
    %s16 = sphi 0, %s28
    %s17 = sphi 0, %s24
    %s18 = sphi 0, %s16
    %s19 = sphi 0, %s17
    %s20 = sphi 0, %s18
    %s21 = sphi 0, %s19
    %s33 = sphi 0, %s35
    %s36 = sphi 0, %s33
    %s37 = sphi 0, %s36
    %s53 = sphi 0, %s37
    %s59 = sphi 0, %s61
    %s62 = sphi 0, %s59
    %s63 = sphi 0, %s62
    %s79 = sphi 0, %s63
    %s85 = sphi 0, %s87
    %s88 = sphi 0, %s85
    %s89 = sphi 0, %s88
    %s105 = sphi 0, %s89
    %s113 = sphi 0, %s115
    %s116 = sphi 0, %s113
    %s117 = sphi 0, %s116
    %s133 = sphi 0, %s117
  $region4: #{_lambda_.12} parent=0 // loop_header_branch
    %12 = sbr.rel (%p10) target = $region8
  $region5: #{_lambda_.12} parent=0 // loop_body
    %s14 = ssub.s32 %s9, 1
    %s15 = ssub.s32 %s9, 2
    %s22 = sadd.s32 1, %s17
    %p23 = scmp.ge.s32.totalorder %s22, 1
    %s24 = scalar_select %p23, 0, %s22
    %s25 = sadd.s32 1, %s16
    %s26 = scalar_select %p23, %s25, %s16
    %p27 = scmp.ge.s32.totalorder %s26, 2
    %s28 = scalar_select %p27, 0, %s26
    %s29 = ssub.s32 %s16, %s28
    %s30 = ssub.s32 %s17, %s24
    %s31 = sor.u32 %s29, %s30
    %p32 = scmp.eq.s32.totalorder %s31, 0
    %s34 = sadd.s32 %s33, 1
    %s35 = scalar_select %p32, %s33, %s34
    %p38 = pneg %p32
    %p39 = scmp.eq.s32.totalorder %s9, 1
    %p40 = por %p38, %p39
    %p41 = scmp.ne.s32.totalorder %s33, %s36
    %p42 = scmp.eq.s32.totalorder %s9, 0
    %p43 = por %p41, %p42
    %p44 = scmp.ne.s32.totalorder %s33, %s36
    %p45 = scmp.eq.s32.totalorder %s14, 1
    %p46 = por %p44, %p45
    %p47 = scmp.ne.s32.totalorder %s36, %s37
    %p48 = scmp.eq.s32.totalorder %s14, 0
    %p49 = por %p47, %p48
    %p50 = scmp.ne.s32.totalorder %s36, %s37
    %p51 = scmp.eq.s32.totalorder %s15, 1
    %p52 = por %p50, %p51
    %p54 = scmp.ne.s32.totalorder %s37, %s53
    %p55 = scmp.eq.s32.totalorder %s15, 0
    %p56 = por %p54, %p55
    %s57 = ssub.s32 %s16, %s28
    %p58 = scmp.eq.s32.totalorder %s57, 0
    %s60 = sadd.s32 %s59, 1
    %s61 = scalar_select %p58, %s59, %s60
    %p64 = pneg %p58
    %p65 = scmp.eq.s32.totalorder %s9, 1
    %p66 = por %p64, %p65
    %p67 = scmp.ne.s32.totalorder %s59, %s62
    %p68 = scmp.eq.s32.totalorder %s9, 0
    %p69 = por %p67, %p68
    %p70 = scmp.ne.s32.totalorder %s59, %s62
    %p71 = scmp.eq.s32.totalorder %s14, 1
    %p72 = por %p70, %p71
    %p73 = scmp.ne.s32.totalorder %s62, %s63
    %p74 = scmp.eq.s32.totalorder %s14, 0
    %p75 = por %p73, %p74
    %p76 = scmp.ne.s32.totalorder %s62, %s63
    %p77 = scmp.eq.s32.totalorder %s15, 1
    %p78 = por %p76, %p77
    %p80 = scmp.ne.s32.totalorder %s63, %s79
    %p81 = scmp.eq.s32.totalorder %s15, 0
    %p82 = por %p80, %p81
    %s83 = ssub.s32 %s17, %s24
    %p84 = scmp.eq.s32.totalorder %s83, 0
    %s86 = sadd.s32 %s85, 1
    %s87 = scalar_select %p84, %s85, %s86
    %p90 = pneg %p84
    %p91 = scmp.eq.s32.totalorder %s9, 1
    %p92 = por %p90, %p91
    %p93 = scmp.ne.s32.totalorder %s85, %s88
    %p94 = scmp.eq.s32.totalorder %s9, 0
    %p95 = por %p93, %p94
    %p96 = scmp.ne.s32.totalorder %s85, %s88
    %p97 = scmp.eq.s32.totalorder %s14, 1
    %p98 = por %p96, %p97
    %p99 = scmp.ne.s32.totalorder %s88, %s89
    %p100 = scmp.eq.s32.totalorder %s14, 0
    %p101 = por %p99, %p100
    %p102 = scmp.ne.s32.totalorder %s88, %s89
    %p103 = scmp.eq.s32.totalorder %s15, 1
    %p104 = por %p102, %p103
    %p106 = scmp.ne.s32.totalorder %s89, %s105
    %p107 = scmp.eq.s32.totalorder %s15, 0
    %p108 = por %p106, %p107
    %s109 = ssub.s32 %s16, %s28
    %s110 = ssub.s32 %s17, %s24
    %s111 = sor.u32 %s109, %s110
    %p112 = scmp.eq.s32.totalorder %s111, 0
    %s114 = sadd.s32 %s113, 1
    %s115 = scalar_select %p112, %s113, %s114
    %p118 = pneg %p112
    %p119 = scmp.eq.s32.totalorder %s9, 1
    %p120 = por %p118, %p119
    %p121 = scmp.ne.s32.totalorder %s113, %s116
    %p122 = scmp.eq.s32.totalorder %s9, 0
    %p123 = por %p121, %p122
    %p124 = scmp.ne.s32.totalorder %s113, %s116
    %p125 = scmp.eq.s32.totalorder %s14, 1
    %p126 = por %p124, %p125
    %p127 = scmp.ne.s32.totalorder %s116, %s117
    %p128 = scmp.eq.s32.totalorder %s14, 0
    %p129 = por %p127, %p128
    %p130 = scmp.ne.s32.totalorder %s116, %s117
    %p131 = scmp.eq.s32.totalorder %s15, 1
    %p132 = por %p130, %p131
    %p134 = scmp.ne.s32.totalorder %s117, %s133
    %p135 = scmp.eq.s32.totalorder %s15, 0
    %p136 = por %p134, %p135
    %p137 = scmp.le.s32.totalorder 1, %s9
    %p138 = scmp.lt.s32.totalorder %s9, 3
    %p139 = pnand %p137, %p138
    %p140 = pneg %p139
    // Predicated region
    $region9: #{_lambda_.12} parent=5 // pred_check
      _
    $region10: #{_lambda_.12} parent=5 // pred_check_branch
      %142 = sbr.rel (%p139) target = $region12
    $region11: #{_lambda_.12} parent=5 // pred_region
      %s143 = ssub.s32 %s9, 1
      // Predicated region
      $region13: #{_lambda_.12} parent=11 // pred_check
        %p144 = pneg %p101
      $region14: #{_lambda_.12} parent=11 // pred_check_branch
        %146 = sbr.rel (%p144) target = $region16
      $region15: #{_lambda_.12} parent=11 // pred_region
        %s147 = smul.u32 16, %s19
        %p148 = scmp.lt.s32.totalorder %s147, 15
        %s149 = scalar_select %p148, %s147, 15
        %s150 = smul.addr %s149, 4
        %s151 = scalar_lea.vmem %s2, %s150
        %s152 = smul.u32 16, %s19
      $region16: #{_lambda_.12} parent=11 // pred_fallthru
        _
    $region12: #{_lambda_.12} parent=5 // pred_fallthru
      _
    %p153 = scmp.lt.s32.totalorder %s9, 2
    // Predicated region
    $region17: #{_lambda_.12} parent=5 // pred_check
      %p154 = pneg %p153
    $region18: #{_lambda_.12} parent=5 // pred_check_branch
      %156 = sbr.rel (%p154) target = $region20
    $region19: #{_lambda_.12} parent=5 // pred_region
      // Predicated region
      $region21: #{_lambda_.12} parent=19 // pred_check
        %p157 = pneg %p43
      $region22: #{_lambda_.12} parent=19 // pred_check_branch
        %159 = sbr.rel (%p157) target = $region24
      $region23: #{_lambda_.12} parent=19 // pred_region
        %s160 = smul.u32 16, %s17
        %p161 = scmp.lt.s32.totalorder %s16, 1
        %s162 = scalar_select %p161, %s16, 1
        %p163 = scmp.lt.s32.totalorder %s160, 15
        %s164 = scalar_select %p163, %s160, 15
        %s165 = smul.addr %s162, 16
        %s166 = sadd.s32 %s164, %s165
        %s167 = smul.addr %s166, 8
        %s168 = scalar_lea.vmem %s0, %s167
        %s169 = smul.u32 16, %s17
      $region24: #{_lambda_.12} parent=19 // pred_fallthru
        _
      // Predicated region
      $region25: #{_lambda_.12} parent=19 // pred_check
        %p170 = pneg %p69
      $region26: #{_lambda_.12} parent=19 // pred_check_branch
        %172 = sbr.rel (%p170) target = $region28
      $region27: #{_lambda_.12} parent=19 // pred_region
        %p173 = scmp.lt.s32.totalorder %s16, 1
        %s174 = scalar_select %p173, %s16, 1
        %s175 = scalar_lea.vmem %s1, %s174
      $region28: #{_lambda_.12} parent=19 // pred_fallthru
        _
    $region20: #{_lambda_.12} parent=5 // pred_fallthru
      _
    %p176 = scmp.le.s32.totalorder 1, %s9
    %p177 = scmp.lt.s32.totalorder %s9, 3
    %p178 = pnand %p176, %p177
    %p179 = pneg %p178
    // Predicated region
    $region29: #{_lambda_.12} parent=5 // pred_check
      _
    $region30: #{_lambda_.12} parent=5 // pred_check_branch
      %181 = sbr.rel (%p178) target = $region32
    $region31: #{_lambda_.12} parent=5 // pred_region
      %s182 = ssub.s32 %s9, 1
      %s183 = smul.u32 16, %s19
      %p184 = scmp.lt.s32.totalorder %s18, 1
      %s185 = scalar_select %p184, %s18, 1
      %p186 = scmp.lt.s32.totalorder %s183, 15
      %s187 = scalar_select %p186, %s183, 15
      %s188 = smul.addr %s185, 16
      %s189 = sadd.s32 %s187, %s188
      %s190 = smul.addr %s189, 8
      %s191 = scalar_lea.vmem %s0, %s190
      %p192 = pneg %p49
      %p193 = pneg %p46
      %p194 = scmp.lt.s32.totalorder %s18, 1
      %s195 = scalar_select %p194, %s18, 1
      %s196 = scalar_lea.vmem %s1, %s195
      %p197 = pneg %p75
      %p198 = pneg %p72
      %s199 = smul.u32 16, %s19
      %p200 = scmp.lt.s32.totalorder %s199, 15
      %s201 = scalar_select %p200, %s199, 15
      %s202 = smul.addr %s201, 4
      %s203 = scalar_lea.vmem %s2, %s202
      %p204 = pneg %p101
      %p205 = pneg %p98
      %p206 = pneg %p129
      %p207 = pneg %p126
      %s208 = smul.u32 16, %s19
      %p209 = scmp.lt.s32.totalorder %s18, 1
      %s210 = scalar_select %p209, %s18, 1
      %p211 = scmp.lt.s32.totalorder %s208, 15
      %s212 = scalar_select %p211, %s208, 15
      %s213 = smul.addr %s210, 16
      %s214 = sadd.s32 %s212, %s213
      %s215 = smul.addr %s214, 4
      %s216 = scalar_lea.vmem %s3, %s215
      %s217 = smul.u32 16, %s19
      %p218 = scmp.lt.s32.totalorder %s18, 1
      %s219 = scalar_select %p218, %s18, 1
      %p220 = scmp.lt.s32.totalorder %s217, 15
      %s221 = scalar_select %p220, %s217, 15
      %s222 = smul.addr %s219, 16
      %s223 = sadd.s32 %s221, %s222
      %s224 = smul.addr %s223, 8
      %s225 = scalar_lea.vmem %s0, %s224
      %s226 = smul.u32 16, %s19
      %p227 = scmp.lt.s32.totalorder %s18, 1
      %s228 = scalar_select %p227, %s18, 1
      %s229 = scalar_lea.vmem %s1, %s228
      %s230 = smul.u32 16, %s19
      %p231 = scmp.lt.s32.totalorder %s230, 15
      %s232 = scalar_select %p231, %s230, 15
      %s233 = smul.addr %s232, 4
      %s234 = scalar_lea.vmem %s2, %s233
      %s235 = smul.u32 16, %s19
      %s236 = smul.u32 16, %s19
      %p237 = scmp.lt.s32.totalorder %s18, 1
      %s238 = scalar_select %p237, %s18, 1
      %p239 = scmp.lt.s32.totalorder %s236, 15
      %s240 = scalar_select %p239, %s236, 15
      %s241 = smul.addr %s238, 16
      %s242 = sadd.s32 %s240, %s241
      %s243 = smul.addr %s242, 4
      %s244 = scalar_lea.vmem %s3, %s243
      %s245 = smul.u32 16, %s19
      %v246 = vld [vmem:[%s225] sm:$0xff]
      %v247 = vld [vmem:[%s225 + $0x8] sm:$0xff]
      %v248 = vld [vmem:[%s225 + $0x10] sm:$0xff]
      %v249 = vld [vmem:[%s225 + $0x18] sm:$0xff]
      %v250 = vld [vmem:[%s225 + $0x20] sm:$0xff]
      %v251 = vld [vmem:[%s225 + $0x28] sm:$0xff]
      %v252 = vld [vmem:[%s225 + $0x30] sm:$0xff]
      %v253 = vld [vmem:[%s225 + $0x38] sm:$0xff]
      %v254 = vld [vmem:[%s225 + $0x40] sm:$0xff]
      %v255 = vld [vmem:[%s225 + $0x48] sm:$0xff]
      %v256 = vld [vmem:[%s225 + $0x50] sm:$0xff]
      %v257 = vld [vmem:[%s225 + $0x58] sm:$0xff]
      %v258 = vld [vmem:[%s225 + $0x60] sm:$0xff]
      %v259 = vld [vmem:[%s225 + $0x68] sm:$0xff]
      %v260 = vld [vmem:[%s225 + $0x70] sm:$0xff]
      %v261 = vld [vmem:[%s225 + $0x78] sm:$0xff]
      %v262 = vld [vmem:[%s229] sm:$0x1]
      %v263 = vld [vmem:[%s234] sm:$0xf]
      %v264 = vld [vmem:[%s234 + $0x4] sm:$0xf]
      %v265 = vld [vmem:[%s234 + $0x8] sm:$0xf]
      %v266 = vld [vmem:[%s234 + $0xc] sm:$0xf]
      %v267 = vld [vmem:[%s234 + $0x10] sm:$0xf]
      %v268 = vld [vmem:[%s234 + $0x14] sm:$0xf]
      %v269 = vld [vmem:[%s234 + $0x18] sm:$0xf]
      %v270 = vld [vmem:[%s234 + $0x1c] sm:$0xf]
      %v271 = vld [vmem:[%s234 + $0x20] sm:$0xf]
      %v272 = vld [vmem:[%s234 + $0x24] sm:$0xf]
      %v273 = vld [vmem:[%s234 + $0x28] sm:$0xf]
      %v274 = vld [vmem:[%s234 + $0x2c] sm:$0xf]
      %v275 = vld [vmem:[%s234 + $0x30] sm:$0xf]
      %v276 = vld [vmem:[%s234 + $0x34] sm:$0xf]
      %v277 = vld [vmem:[%s234 + $0x38] sm:$0xf]
      %v278 = vld [vmem:[%s234 + $0x3c] sm:$0xf]
      %v279 = vunpack.c.l.bf16 %v263
      %v280 = vunpack.c.l.bf16 %v264
      %v281 = vunpack.c.l.bf16 %v265
      %v282 = vunpack.c.l.bf16 %v266
      %v283 = vunpack.c.l.bf16 %v267
      %v284 = vunpack.c.l.bf16 %v268
      %v285 = vunpack.c.l.bf16 %v269
      %v286 = vunpack.c.l.bf16 %v270
      %v287 = vunpack.c.l.bf16 %v271
      %v288 = vunpack.c.l.bf16 %v272
      %v289 = vunpack.c.l.bf16 %v273
      %v290 = vunpack.c.l.bf16 %v274
      %v291 = vunpack.c.l.bf16 %v275
      %v292 = vunpack.c.l.bf16 %v276
      %v293 = vunpack.c.l.bf16 %v277
      %v294 = vunpack.c.l.bf16 %v278
      %vm295 = vcmp.gt.f32.partialorder %v279, 0.0
      %vm296 = vcmp.gt.f32.partialorder %v280, 0.0
      %vm297 = vcmp.gt.f32.partialorder %v281, 0.0
      %vm298 = vcmp.gt.f32.partialorder %v282, 0.0
      %vm299 = vcmp.gt.f32.partialorder %v283, 0.0
      %vm300 = vcmp.gt.f32.partialorder %v284, 0.0
      %vm301 = vcmp.gt.f32.partialorder %v285, 0.0
      %vm302 = vcmp.gt.f32.partialorder %v286, 0.0
      %vm303 = vcmp.gt.f32.partialorder %v287, 0.0
      %vm304 = vcmp.gt.f32.partialorder %v288, 0.0
      %vm305 = vcmp.gt.f32.partialorder %v289, 0.0
      %vm306 = vcmp.gt.f32.partialorder %v290, 0.0
      %vm307 = vcmp.gt.f32.partialorder %v291, 0.0
      %vm308 = vcmp.gt.f32.partialorder %v292, 0.0
      %vm309 = vcmp.gt.f32.partialorder %v293, 0.0
      %vm310 = vcmp.gt.f32.partialorder %v294, 0.0
      %312 = vset.pattern.permute.xlu0 0
      %313 = vperm.xlu0 %312, %v246
      %v314 = vpop.permute.xlu0 %313
      %317 = vset.pattern.permute.xlu0 0
      %318 = vperm.xlu0 %317, %v247
      %v319 = vpop.permute.xlu0 %318
      %322 = vset.pattern.permute.xlu0 0
      %323 = vperm.xlu0 %322, %v248
      %v324 = vpop.permute.xlu0 %323
      %327 = vset.pattern.permute.xlu0 0
      %328 = vperm.xlu0 %327, %v249
      %v329 = vpop.permute.xlu0 %328
      %332 = vset.pattern.permute.xlu0 0
      %333 = vperm.xlu0 %332, %v250
      %v334 = vpop.permute.xlu0 %333
      %337 = vset.pattern.permute.xlu0 0
      %338 = vperm.xlu0 %337, %v251
      %v339 = vpop.permute.xlu0 %338
      %342 = vset.pattern.permute.xlu0 0
      %343 = vperm.xlu0 %342, %v252
      %v344 = vpop.permute.xlu0 %343
      %347 = vset.pattern.permute.xlu0 0
      %348 = vperm.xlu0 %347, %v253
      %v349 = vpop.permute.xlu0 %348
      %352 = vset.pattern.permute.xlu0 0
      %353 = vperm.xlu0 %352, %v254
      %v354 = vpop.permute.xlu0 %353
      %357 = vset.pattern.permute.xlu0 0
      %358 = vperm.xlu0 %357, %v255
      %v359 = vpop.permute.xlu0 %358
      %362 = vset.pattern.permute.xlu0 0
      %363 = vperm.xlu0 %362, %v256
      %v364 = vpop.permute.xlu0 %363
      %367 = vset.pattern.permute.xlu0 0
      %368 = vperm.xlu0 %367, %v257
      %v369 = vpop.permute.xlu0 %368
      %372 = vset.pattern.permute.xlu0 0
      %373 = vperm.xlu0 %372, %v258
      %v374 = vpop.permute.xlu0 %373
      %377 = vset.pattern.permute.xlu0 0
      %378 = vperm.xlu0 %377, %v259
      %v379 = vpop.permute.xlu0 %378
      %382 = vset.pattern.permute.xlu0 0
      %383 = vperm.xlu0 %382, %v260
      %v384 = vpop.permute.xlu0 %383
      %387 = vset.pattern.permute.xlu0 0
      %388 = vperm.xlu0 %387, %v261
      %v389 = vpop.permute.xlu0 %388
      %v392 = vlaneseq
      %v393 = vshrl.u32 %v392, 7
      %v394 = vsub.s32 0, %v393
      %v395 = vrot.slane %v262, %v394
      %v397 = vadd.f32 %v314, %v395
      %v398 = vadd.f32 %v319, %v395
      %v399 = vadd.f32 %v324, %v395
      %v400 = vadd.f32 %v329, %v395
      %v401 = vadd.f32 %v334, %v395
      %v402 = vadd.f32 %v339, %v395
      %v403 = vadd.f32 %v344, %v395
      %v404 = vadd.f32 %v349, %v395
      %v405 = vadd.f32 %v354, %v395
      %v406 = vadd.f32 %v359, %v395
      %v407 = vadd.f32 %v364, %v395
      %v408 = vadd.f32 %v369, %v395
      %v409 = vadd.f32 %v374, %v395
      %v410 = vadd.f32 %v379, %v395
      %v411 = vadd.f32 %v384, %v395
      %v412 = vadd.f32 %v389, %v395
      %vm413 = vcmp.gt.f32.partialorder %v397, 0.0
      %vm414 = vcmp.gt.f32.partialorder %v398, 0.0
      %vm415 = vcmp.gt.f32.partialorder %v399, 0.0
      %vm416 = vcmp.gt.f32.partialorder %v400, 0.0
      %vm417 = vcmp.gt.f32.partialorder %v401, 0.0
      %vm418 = vcmp.gt.f32.partialorder %v402, 0.0
      %vm419 = vcmp.gt.f32.partialorder %v403, 0.0
      %vm420 = vcmp.gt.f32.partialorder %v404, 0.0
      %vm421 = vcmp.gt.f32.partialorder %v405, 0.0
      %vm422 = vcmp.gt.f32.partialorder %v406, 0.0
      %vm423 = vcmp.gt.f32.partialorder %v407, 0.0
      %vm424 = vcmp.gt.f32.partialorder %v408, 0.0
      %vm425 = vcmp.gt.f32.partialorder %v409, 0.0
      %vm426 = vcmp.gt.f32.partialorder %v410, 0.0
      %vm427 = vcmp.gt.f32.partialorder %v411, 0.0
      %vm428 = vcmp.gt.f32.partialorder %v412, 0.0
      %v429 = vmul.f32 %v397, 0.2
      %v430 = vmul.f32 %v398, 0.2
      %v431 = vmul.f32 %v399, 0.2
      %v432 = vmul.f32 %v400, 0.2
      %v433 = vmul.f32 %v401, 0.2
      %v434 = vmul.f32 %v402, 0.2
      %v435 = vmul.f32 %v403, 0.2
      %v436 = vmul.f32 %v404, 0.2
      %v437 = vmul.f32 %v405, 0.2
      %v438 = vmul.f32 %v406, 0.2
      %v439 = vmul.f32 %v407, 0.2
      %v440 = vmul.f32 %v408, 0.2
      %v441 = vmul.f32 %v409, 0.2
      %v442 = vmul.f32 %v410, 0.2
      %v443 = vmul.f32 %v411, 0.2
      %v444 = vmul.f32 %v412, 0.2
      %v445 = vsel %vm413, %v397, %v429
      %v446 = vsel %vm414, %v398, %v430
      %v447 = vsel %vm415, %v399, %v431
      %v448 = vsel %vm416, %v400, %v432
      %v449 = vsel %vm417, %v401, %v433
      %v450 = vsel %vm418, %v402, %v434
      %v451 = vsel %vm419, %v403, %v435
      %v452 = vsel %vm420, %v404, %v436
      %v453 = vsel %vm421, %v405, %v437
      %v454 = vsel %vm422, %v406, %v438
      %v455 = vsel %vm423, %v407, %v439
      %v456 = vsel %vm424, %v408, %v440
      %v457 = vsel %vm425, %v409, %v441
      %v458 = vsel %vm426, %v410, %v442
      %v459 = vsel %vm427, %v411, %v443
      %v460 = vsel %vm428, %v412, %v444
      %v461 = vsel %vm295, %v445, -1e+30
      %v462 = vsel %vm296, %v446, -1e+30
      %v463 = vsel %vm297, %v447, -1e+30
      %v464 = vsel %vm298, %v448, -1e+30
      %v465 = vsel %vm299, %v449, -1e+30
      %v466 = vsel %vm300, %v450, -1e+30
      %v467 = vsel %vm301, %v451, -1e+30
      %v468 = vsel %vm302, %v452, -1e+30
      %v469 = vsel %vm303, %v453, -1e+30
      %v470 = vsel %vm304, %v454, -1e+30
      %v471 = vsel %vm305, %v455, -1e+30
      %v472 = vsel %vm306, %v456, -1e+30
      %v473 = vsel %vm307, %v457, -1e+30
      %v474 = vsel %vm308, %v458, -1e+30
      %v475 = vsel %vm309, %v459, -1e+30
      %v476 = vsel %vm310, %v460, -1e+30
      %477 = vmax.xlane.f32.xlu0 %v461
      %v478 = vpop.xlane.xlu0 %477
      %479 = vmax.xlane.f32.xlu0 %v462
      %v480 = vpop.xlane.xlu0 %479
      %481 = vmax.xlane.f32.xlu0 %v463
      %v482 = vpop.xlane.xlu0 %481
      %483 = vmax.xlane.f32.xlu0 %v464
      %v484 = vpop.xlane.xlu0 %483
      %485 = vmax.xlane.f32.xlu0 %v465
      %v486 = vpop.xlane.xlu0 %485
      %487 = vmax.xlane.f32.xlu0 %v466
      %v488 = vpop.xlane.xlu0 %487
      %489 = vmax.xlane.f32.xlu0 %v467
      %v490 = vpop.xlane.xlu0 %489
      %491 = vmax.xlane.f32.xlu0 %v468
      %v492 = vpop.xlane.xlu0 %491
      %493 = vmax.xlane.f32.xlu0 %v469
      %v494 = vpop.xlane.xlu0 %493
      %495 = vmax.xlane.f32.xlu0 %v470
      %v496 = vpop.xlane.xlu0 %495
      %497 = vmax.xlane.f32.xlu0 %v471
      %v498 = vpop.xlane.xlu0 %497
      %499 = vmax.xlane.f32.xlu0 %v472
      %v500 = vpop.xlane.xlu0 %499
      %501 = vmax.xlane.f32.xlu0 %v473
      %v502 = vpop.xlane.xlu0 %501
      %503 = vmax.xlane.f32.xlu0 %v474
      %v504 = vpop.xlane.xlu0 %503
      %505 = vmax.xlane.f32.xlu0 %v475
      %v506 = vpop.xlane.xlu0 %505
      %507 = vmax.xlane.f32.xlu0 %v476
      %v508 = vpop.xlane.xlu0 %507
      %v509 = vsub.f32 %v461, %v478
      %v510 = vsub.f32 %v462, %v480
      %v511 = vsub.f32 %v463, %v482
      %v512 = vsub.f32 %v464, %v484
      %v513 = vsub.f32 %v465, %v486
      %v514 = vsub.f32 %v466, %v488
      %v515 = vsub.f32 %v467, %v490
      %v516 = vsub.f32 %v468, %v492
      %v517 = vsub.f32 %v469, %v494
      %v518 = vsub.f32 %v470, %v496
      %v519 = vsub.f32 %v471, %v498
      %v520 = vsub.f32 %v472, %v500
      %v521 = vsub.f32 %v473, %v502
      %v522 = vsub.f32 %v474, %v504
      %v523 = vsub.f32 %v475, %v506
      %v524 = vsub.f32 %v476, %v508
      %v525 = vmul.f32 %v509, 1.442695
      %v526 = vpow.pop %v525
      %v527 = vmul.f32 %v510, 1.442695
      %v528 = vpow.pop %v527
      %v529 = vmul.f32 %v511, 1.442695
      %v530 = vpow.pop %v529
      %v531 = vmul.f32 %v512, 1.442695
      %v532 = vpow.pop %v531
      %v533 = vmul.f32 %v513, 1.442695
      %v534 = vpow.pop %v533
      %v535 = vmul.f32 %v514, 1.442695
      %v536 = vpow.pop %v535
      %v537 = vmul.f32 %v515, 1.442695
      %v538 = vpow.pop %v537
      %v539 = vmul.f32 %v516, 1.442695
      %v540 = vpow.pop %v539
      %v541 = vmul.f32 %v517, 1.442695
      %v542 = vpow.pop %v541
      %v543 = vmul.f32 %v518, 1.442695
      %v544 = vpow.pop %v543
      %v545 = vmul.f32 %v519, 1.442695
      %v546 = vpow.pop %v545
      %v547 = vmul.f32 %v520, 1.442695
      %v548 = vpow.pop %v547
      %v549 = vmul.f32 %v521, 1.442695
      %v550 = vpow.pop %v549
      %v551 = vmul.f32 %v522, 1.442695
      %v552 = vpow.pop %v551
      %v553 = vmul.f32 %v523, 1.442695
      %v554 = vpow.pop %v553
      %v555 = vmul.f32 %v524, 1.442695
      %v556 = vpow.pop %v555
      %557 = vadd.xlane.f32.xlu0 %v526
      %v558 = vpop.xlane.xlu0 %557
      %559 = vadd.xlane.f32.xlu0 %v528
      %v560 = vpop.xlane.xlu0 %559
      %561 = vadd.xlane.f32.xlu0 %v530
      %v562 = vpop.xlane.xlu0 %561
      %563 = vadd.xlane.f32.xlu0 %v532
      %v564 = vpop.xlane.xlu0 %563
      %565 = vadd.xlane.f32.xlu0 %v534
      %v566 = vpop.xlane.xlu0 %565
      %567 = vadd.xlane.f32.xlu0 %v536
      %v568 = vpop.xlane.xlu0 %567
      %569 = vadd.xlane.f32.xlu0 %v538
      %v570 = vpop.xlane.xlu0 %569
      %571 = vadd.xlane.f32.xlu0 %v540
      %v572 = vpop.xlane.xlu0 %571
      %573 = vadd.xlane.f32.xlu0 %v542
      %v574 = vpop.xlane.xlu0 %573
      %575 = vadd.xlane.f32.xlu0 %v544
      %v576 = vpop.xlane.xlu0 %575
      %577 = vadd.xlane.f32.xlu0 %v546
      %v578 = vpop.xlane.xlu0 %577
      %579 = vadd.xlane.f32.xlu0 %v548
      %v580 = vpop.xlane.xlu0 %579
      %581 = vadd.xlane.f32.xlu0 %v550
      %v582 = vpop.xlane.xlu0 %581
      %583 = vadd.xlane.f32.xlu0 %v552
      %v584 = vpop.xlane.xlu0 %583
      %585 = vadd.xlane.f32.xlu0 %v554
      %v586 = vpop.xlane.xlu0 %585
      %587 = vadd.xlane.f32.xlu0 %v556
      %v588 = vpop.xlane.xlu0 %587
      %vm589 = vcmp.gt.f32.partialorder %v478, -5e+29
      %vm590 = vcmp.gt.f32.partialorder %v480, -5e+29
      %vm591 = vcmp.gt.f32.partialorder %v482, -5e+29
      %vm592 = vcmp.gt.f32.partialorder %v484, -5e+29
      %vm593 = vcmp.gt.f32.partialorder %v486, -5e+29
      %vm594 = vcmp.gt.f32.partialorder %v488, -5e+29
      %vm595 = vcmp.gt.f32.partialorder %v490, -5e+29
      %vm596 = vcmp.gt.f32.partialorder %v492, -5e+29
      %vm597 = vcmp.gt.f32.partialorder %v494, -5e+29
      %vm598 = vcmp.gt.f32.partialorder %v496, -5e+29
      %vm599 = vcmp.gt.f32.partialorder %v498, -5e+29
      %vm600 = vcmp.gt.f32.partialorder %v500, -5e+29
      %vm601 = vcmp.gt.f32.partialorder %v502, -5e+29
      %vm602 = vcmp.gt.f32.partialorder %v504, -5e+29
      %vm603 = vcmp.gt.f32.partialorder %v506, -5e+29
      %vm604 = vcmp.gt.f32.partialorder %v508, -5e+29
      %v605 = vrcp.pop %v558
      %v606 = vrcp.pop %v560
      %v607 = vrcp.pop %v562
      %v608 = vrcp.pop %v564
      %v609 = vrcp.pop %v566
      %v610 = vrcp.pop %v568
      %v611 = vrcp.pop %v570
      %v612 = vrcp.pop %v572
      %v613 = vrcp.pop %v574
      %v614 = vrcp.pop %v576
      %v615 = vrcp.pop %v578
      %v616 = vrcp.pop %v580
      %v617 = vrcp.pop %v582
      %v618 = vrcp.pop %v584
      %v619 = vrcp.pop %v586
      %v620 = vrcp.pop %v588
      %v621 = vsel %vm589, %v605, 0.0
      %v622 = vsel %vm590, %v606, 0.0
      %v623 = vsel %vm591, %v607, 0.0
      %v624 = vsel %vm592, %v608, 0.0
      %v625 = vsel %vm593, %v609, 0.0
      %v626 = vsel %vm594, %v610, 0.0
      %v627 = vsel %vm595, %v611, 0.0
      %v628 = vsel %vm596, %v612, 0.0
      %v629 = vsel %vm597, %v613, 0.0
      %v630 = vsel %vm598, %v614, 0.0
      %v631 = vsel %vm599, %v615, 0.0
      %v632 = vsel %vm600, %v616, 0.0
      %v633 = vsel %vm601, %v617, 0.0
      %v634 = vsel %vm602, %v618, 0.0
      %v635 = vsel %vm603, %v619, 0.0
      %v636 = vsel %vm604, %v620, 0.0
      %v637 = vmul.f32 %v526, %v621
      %v638 = vmul.f32 %v528, %v622
      %v639 = vmul.f32 %v530, %v623
      %v640 = vmul.f32 %v532, %v624
      %v641 = vmul.f32 %v534, %v625
      %v642 = vmul.f32 %v536, %v626
      %v643 = vmul.f32 %v538, %v627
      %v644 = vmul.f32 %v540, %v628
      %v645 = vmul.f32 %v542, %v629
      %v646 = vmul.f32 %v544, %v630
      %v647 = vmul.f32 %v546, %v631
      %v648 = vmul.f32 %v548, %v632
      %v649 = vmul.f32 %v550, %v633
      %v650 = vmul.f32 %v552, %v634
      %v651 = vmul.f32 %v554, %v635
      %v652 = vmul.f32 %v556, %v636
      %v653 = vpack.c.bf16 %v638, %v637
      %v654 = vpack.c.bf16 %v640, %v639
      %v655 = vpack.c.bf16 %v642, %v641
      %v656 = vpack.c.bf16 %v644, %v643
      %v657 = vpack.c.bf16 %v646, %v645
      %v658 = vpack.c.bf16 %v648, %v647
      %v659 = vpack.c.bf16 %v650, %v649
      %v660 = vpack.c.bf16 %v652, %v651
      %v669 = vunpack.c.l.b16 %v653
      %v670 = vunpack.c.h.b16 %v653
      %v671 = vunpack.c.l.b16 %v654
      %v672 = vunpack.c.h.b16 %v654
      %v673 = vunpack.c.l.b16 %v655
      %v674 = vunpack.c.h.b16 %v655
      %v675 = vunpack.c.l.b16 %v656
      %v676 = vunpack.c.h.b16 %v656
      %v677 = vunpack.c.l.b16 %v657
      %v678 = vunpack.c.h.b16 %v657
      %v679 = vunpack.c.l.b16 %v658
      %v680 = vunpack.c.h.b16 %v658
      %v681 = vunpack.c.l.b16 %v659
      %v682 = vunpack.c.h.b16 %v659
      %v683 = vunpack.c.l.b16 %v660
      %v684 = vunpack.c.h.b16 %v660
      %v685 = vpack.c.b16 %v669, %v669
      %v686 = vpack.c.b16 %v670, %v670
      %v687 = vpack.c.b16 %v671, %v671
      %v688 = vpack.c.b16 %v672, %v672
      %v689 = vpack.c.b16 %v673, %v673
      %v690 = vpack.c.b16 %v674, %v674
      %v691 = vpack.c.b16 %v675, %v675
      %v692 = vpack.c.b16 %v676, %v676
      %v693 = vpack.c.b16 %v677, %v677
      %v694 = vpack.c.b16 %v678, %v678
      %v695 = vpack.c.b16 %v679, %v679
      %v696 = vpack.c.b16 %v680, %v680
      %v697 = vpack.c.b16 %v681, %v681
      %v698 = vpack.c.b16 %v682, %v682
      %v699 = vpack.c.b16 %v683, %v683
      %v700 = vpack.c.b16 %v684, %v684
      %717 = vst [vmem:[%s244] sm:$0xf] %v685
      %718 = vst [vmem:[%s244 + $0x4] sm:$0xf] %v686
      %719 = vst [vmem:[%s244 + $0x8] sm:$0xf] %v687
      %720 = vst [vmem:[%s244 + $0xc] sm:$0xf] %v688
      %721 = vst [vmem:[%s244 + $0x10] sm:$0xf] %v689
      %722 = vst [vmem:[%s244 + $0x14] sm:$0xf] %v690
      %723 = vst [vmem:[%s244 + $0x18] sm:$0xf] %v691
      %724 = vst [vmem:[%s244 + $0x1c] sm:$0xf] %v692
      %725 = vst [vmem:[%s244 + $0x20] sm:$0xf] %v693
      %726 = vst [vmem:[%s244 + $0x24] sm:$0xf] %v694
      %727 = vst [vmem:[%s244 + $0x28] sm:$0xf] %v695
      %728 = vst [vmem:[%s244 + $0x2c] sm:$0xf] %v696
      %729 = vst [vmem:[%s244 + $0x30] sm:$0xf] %v697
      %730 = vst [vmem:[%s244 + $0x34] sm:$0xf] %v698
      %731 = vst [vmem:[%s244 + $0x38] sm:$0xf] %v699
      %732 = vst [vmem:[%s244 + $0x3c] sm:$0xf] %v700
      %s733 = smul.u32 16, %s19
      %p734 = scmp.lt.s32.totalorder %s18, 1
      %s735 = scalar_select %p734, %s18, 1
      %p736 = scmp.lt.s32.totalorder %s733, 15
      %s737 = scalar_select %p736, %s733, 15
      %s738 = smul.addr %s735, 16
      %s739 = sadd.s32 %s737, %s738
      %s740 = smul.addr %s739, 4
      %s741 = scalar_lea.vmem %s3, %s740
      // Predicated region
      $region33: #{_lambda_.12} parent=31 // pred_check
        %p742 = pneg %p126
      $region34: #{_lambda_.12} parent=31 // pred_check_branch
        %744 = sbr.rel (%p742) target = $region36
      $region35: #{_lambda_.12} parent=31 // pred_region
        %s745 = smul.u32 16, %s19
      $region36: #{_lambda_.12} parent=31 // pred_fallthru
        _
    $region32: #{_lambda_.12} parent=5 // pred_fallthru
      _
    %p746 = scmp.le.s32.totalorder 2, %s9
    // Predicated region
    $region37: #{_lambda_.12} parent=5 // pred_check
      %p747 = pneg %p746
    $region38: #{_lambda_.12} parent=5 // pred_check_branch
      %749 = sbr.rel (%p747) target = $region40
    $region39: #{_lambda_.12} parent=5 // pred_region
      %s750 = ssub.s32 %s9, 2
      // Predicated region
      $region41: #{_lambda_.12} parent=39 // pred_check
        %p751 = pneg %p132
      $region42: #{_lambda_.12} parent=39 // pred_check_branch
        %753 = sbr.rel (%p751) target = $region44
      $region43: #{_lambda_.12} parent=39 // pred_region
        %s754 = smul.u32 16, %s21
        %p755 = scmp.lt.s32.totalorder %s20, 1
        %s756 = scalar_select %p755, %s20, 1
        %p757 = scmp.lt.s32.totalorder %s754, 15
        %s758 = scalar_select %p757, %s754, 15
        %s759 = smul.addr %s756, 16
        %s760 = sadd.s32 %s758, %s759
        %s761 = smul.addr %s760, 4
        %s762 = scalar_lea.vmem %s3, %s761
      $region44: #{_lambda_.12} parent=39 // pred_fallthru
        _
    $region40: #{_lambda_.12} parent=5 // pred_fallthru
      _
  $region6: #{_lambda_.12} parent=0 // loop_footer
    %s13 = sadd.s32 1, %s9
  $region7: #{_lambda_.12} parent=0 // loop_footer_branch
    %8 = sbr.rel target = $region3
  $region8: #{_lambda_.12} parent=0 // loop_exit
    _

// kernel: _lambda_.15
$region0: #{_lambda_.15}
  #allocation0 [shape = 'u32[]', space=smem, size = 0x4, offset = 0x4, fixed_abs, tag = 'smem constant byte address 0x4 - core index']
  #allocation1 [shape = 'u32[144,128]{1,0:T(1,128)}', space=vmem, size = 0x12000, scoped, tag = 'internal scratch']
  %s0 = inlined_call_operand.vmem [shape: f32[128,256], index: 0, kind: input, shape index: {}]
  %s1 = inlined_call_operand.vmem [shape: f32[128,128], index: 1, kind: output, shape index: {}]
  %s2 = sld [smem:[#allocation0]]
  $region14: #{_lambda_.15} parent=0
    _
  %s4 = ssub.s32 1, %s2
  %s5 = scalar_select 0, %s4, %s2
  // Predicated region
  $region2: #{_lambda_.15} parent=0 // pred_check
    _
  $region3: #{_lambda_.15} parent=0 // pred_check_branch
    %7 = sbr.rel (0) target = $region5
  $region4: #{_lambda_.15} parent=0 // pred_region
    _
  $region5: #{_lambda_.15} parent=0 // pred_fallthru
    _
  %v8 = vld [vmem:[%s0] sm:$0xff]
  %v9 = vld [vmem:[%s0 + $0x8] sm:$0xff]
  %v10 = vld [vmem:[%s0 + $0x10] sm:$0xff]
  %v11 = vld [vmem:[%s0 + $0x18] sm:$0xff]
  %v12 = vld [vmem:[%s0 + $0x20] sm:$0xff]
  %v13 = vld [vmem:[%s0 + $0x28] sm:$0xff]
  %v14 = vld [vmem:[%s0 + $0x30] sm:$0xff]
  %v15 = vld [vmem:[%s0 + $0x38] sm:$0xff]
  %v16 = vld [vmem:[%s0 + $0x40] sm:$0xff]
  %v17 = vld [vmem:[%s0 + $0x48] sm:$0xff]
  %v18 = vld [vmem:[%s0 + $0x50] sm:$0xff]
  %v19 = vld [vmem:[%s0 + $0x58] sm:$0xff]
  %v20 = vld [vmem:[%s0 + $0x60] sm:$0xff]
  %v21 = vld [vmem:[%s0 + $0x68] sm:$0xff]
  %v22 = vld [vmem:[%s0 + $0x70] sm:$0xff]
  %v23 = vld [vmem:[%s0 + $0x78] sm:$0xff]
  %v24 = vld [vmem:[%s0 + $0x80] sm:$0xff]
  %v25 = vld [vmem:[%s0 + $0x88] sm:$0xff]
  %v26 = vld [vmem:[%s0 + $0x90] sm:$0xff]
  %v27 = vld [vmem:[%s0 + $0x98] sm:$0xff]
  %v28 = vld [vmem:[%s0 + $0xa0] sm:$0xff]
  %v29 = vld [vmem:[%s0 + $0xa8] sm:$0xff]
  %v30 = vld [vmem:[%s0 + $0xb0] sm:$0xff]
  %v31 = vld [vmem:[%s0 + $0xb8] sm:$0xff]
  %v32 = vld [vmem:[%s0 + $0xc0] sm:$0xff]
  %v33 = vld [vmem:[%s0 + $0xc8] sm:$0xff]
  %v34 = vld [vmem:[%s0 + $0xd0] sm:$0xff]
  %v35 = vld [vmem:[%s0 + $0xd8] sm:$0xff]
  %v36 = vld [vmem:[%s0 + $0xe0] sm:$0xff]
  %v37 = vld [vmem:[%s0 + $0xe8] sm:$0xff]
  %v38 = vld [vmem:[%s0 + $0xf0] sm:$0xff]
  %v39 = vld [vmem:[%s0 + $0xf8] sm:$0xff]
  %v40 = vadd.f32 %v8, %v9
  %v41 = vadd.f32 %v10, %v11
  %v42 = vadd.f32 %v12, %v13
  %v43 = vadd.f32 %v14, %v15
  %v44 = vadd.f32 %v16, %v17
  %v45 = vadd.f32 %v18, %v19
  %v46 = vadd.f32 %v20, %v21
  %v47 = vadd.f32 %v22, %v23
  %v48 = vadd.f32 %v24, %v25
  %v49 = vadd.f32 %v26, %v27
  %v50 = vadd.f32 %v28, %v29
  %v51 = vadd.f32 %v30, %v31
  %v52 = vadd.f32 %v32, %v33
  %v53 = vadd.f32 %v34, %v35
  %v54 = vadd.f32 %v36, %v37
  %v55 = vadd.f32 %v38, %v39
  %v56 = vmul.f32 %v40, 0.5
  %v57 = vmul.f32 %v41, 0.5
  %v58 = vmul.f32 %v42, 0.5
  %v59 = vmul.f32 %v43, 0.5
  %v60 = vmul.f32 %v44, 0.5
  %v61 = vmul.f32 %v45, 0.5
  %v62 = vmul.f32 %v46, 0.5
  %v63 = vmul.f32 %v47, 0.5
  %v64 = vmul.f32 %v48, 0.5
  %v65 = vmul.f32 %v49, 0.5
  %v66 = vmul.f32 %v50, 0.5
  %v67 = vmul.f32 %v51, 0.5
  %v68 = vmul.f32 %v52, 0.5
  %v69 = vmul.f32 %v53, 0.5
  %v70 = vmul.f32 %v54, 0.5
  %v71 = vmul.f32 %v55, 0.5
  %72 = vst [vmem:[%s1] sm:$0xff] %v56
  %73 = vst [vmem:[%s1 + $0x8] sm:$0xff] %v57
  %74 = vst [vmem:[%s1 + $0x10] sm:$0xff] %v58
  %75 = vst [vmem:[%s1 + $0x18] sm:$0xff] %v59
  %76 = vst [vmem:[%s1 + $0x20] sm:$0xff] %v60
  %77 = vst [vmem:[%s1 + $0x28] sm:$0xff] %v61
  %78 = vst [vmem:[%s1 + $0x30] sm:$0xff] %v62
  %79 = vst [vmem:[%s1 + $0x38] sm:$0xff] %v63
  %80 = vst [vmem:[%s1 + $0x40] sm:$0xff] %v64
  %81 = vst [vmem:[%s1 + $0x48] sm:$0xff] %v65
  %82 = vst [vmem:[%s1 + $0x50] sm:$0xff] %v66
  %83 = vst [vmem:[%s1 + $0x58] sm:$0xff] %v67
  %84 = vst [vmem:[%s1 + $0x60] sm:$0xff] %v68
  %85 = vst [vmem:[%s1 + $0x68] sm:$0xff] %v69
  %86 = vst [vmem:[%s1 + $0x70] sm:$0xff] %v70
  %87 = vst [vmem:[%s1 + $0x78] sm:$0xff] %v71
  // Predicated region
  $region6: #{_lambda_.15} parent=0 // pred_check
    _
  $region7: #{_lambda_.15} parent=0 // pred_check_branch
    %89 = sbr.rel (0) target = $region9
  $region8: #{_lambda_.15} parent=0 // pred_region
    _
  $region9: #{_lambda_.15} parent=0 // pred_fallthru
    _
  // Predicated region
  $region10: #{_lambda_.15} parent=0 // pred_check
    _
  $region11: #{_lambda_.15} parent=0 // pred_check_branch
    %91 = sbr.rel (0) target = $region13
  $region12: #{_lambda_.15} parent=0 // pred_region
    _
  $region13: #{_lambda_.15} parent=0 // pred_fallthru
    _

// kernel: _lambda_.21
$region0: #{_lambda_.21}
  #allocation0 [shape = 'u32[]', space=smem, size = 0x4, offset = 0x4, fixed_abs, tag = 'smem constant byte address 0x4 - core index']
  #allocation1 [shape = 'u32[144,128]{1,0:T(1,128)}', space=vmem, size = 0x12000, scoped, tag = 'internal scratch']
  %s0 = inlined_call_operand.vmem [shape: f32[128,128], index: 0, kind: input, shape index: {}]
  %s1 = inlined_call_operand.vmem [shape: bf16[128,128], index: 1, kind: input, shape index: {}]
  %s2 = inlined_call_operand.vmem [shape: f32[128,128], index: 2, kind: output, shape index: {}]
  %s3 = sld [smem:[#allocation0]]
  $region18: #{_lambda_.21} parent=0
    _
  %s5 = ssub.s32 1, %s3
  %s6 = scalar_select 0, %s5, %s3
  // Predicated region
  $region2: #{_lambda_.21} parent=0 // pred_check
    _
  $region3: #{_lambda_.21} parent=0 // pred_check_branch
    %8 = sbr.rel (0) target = $region5
  $region4: #{_lambda_.21} parent=0 // pred_region
    _
  $region5: #{_lambda_.21} parent=0 // pred_fallthru
    _
  // Predicated region
  $region6: #{_lambda_.21} parent=0 // pred_check
    _
  $region7: #{_lambda_.21} parent=0 // pred_check_branch
    %10 = sbr.rel (0) target = $region9
  $region8: #{_lambda_.21} parent=0 // pred_region
    _
  $region9: #{_lambda_.21} parent=0 // pred_fallthru
    _
  %v12 = vld [vmem:[%s0] sm:$0xff]
  %v13 = vld [vmem:[%s0 + $0x8] sm:$0xff]
  %v14 = vld [vmem:[%s0 + $0x10] sm:$0xff]
  %v15 = vld [vmem:[%s0 + $0x18] sm:$0xff]
  %v16 = vld [vmem:[%s0 + $0x20] sm:$0xff]
  %v17 = vld [vmem:[%s0 + $0x28] sm:$0xff]
  %v18 = vld [vmem:[%s0 + $0x30] sm:$0xff]
  %v19 = vld [vmem:[%s0 + $0x38] sm:$0xff]
  %v20 = vld [vmem:[%s0 + $0x40] sm:$0xff]
  %v21 = vld [vmem:[%s0 + $0x48] sm:$0xff]
  %v22 = vld [vmem:[%s0 + $0x50] sm:$0xff]
  %v23 = vld [vmem:[%s0 + $0x58] sm:$0xff]
  %v24 = vld [vmem:[%s0 + $0x60] sm:$0xff]
  %v25 = vld [vmem:[%s0 + $0x68] sm:$0xff]
  %v26 = vld [vmem:[%s0 + $0x70] sm:$0xff]
  %v27 = vld [vmem:[%s0 + $0x78] sm:$0xff]
  %v28 = vpack.c.bf16 %v13, %v12
  %v29 = vpack.c.bf16 %v15, %v14
  %v30 = vpack.c.bf16 %v17, %v16
  %v31 = vpack.c.bf16 %v19, %v18
  %v32 = vpack.c.bf16 %v21, %v20
  %v33 = vpack.c.bf16 %v23, %v22
  %v34 = vpack.c.bf16 %v25, %v24
  %v35 = vpack.c.bf16 %v27, %v26
  %v36 = vld [vmem:[%s1] sm:$0xf]
  %v37 = vld [vmem:[%s1 + $0x4] sm:$0xf]
  %v38 = vld [vmem:[%s1 + $0x8] sm:$0xf]
  %v39 = vld [vmem:[%s1 + $0xc] sm:$0xf]
  %v40 = vld [vmem:[%s1 + $0x10] sm:$0xf]
  %v41 = vld [vmem:[%s1 + $0x14] sm:$0xf]
  %v42 = vld [vmem:[%s1 + $0x18] sm:$0xf]
  %v43 = vld [vmem:[%s1 + $0x1c] sm:$0xf]
  %v44 = vld [vmem:[%s1 + $0x20] sm:$0xf]
  %v45 = vld [vmem:[%s1 + $0x24] sm:$0xf]
  %v46 = vld [vmem:[%s1 + $0x28] sm:$0xf]
  %v47 = vld [vmem:[%s1 + $0x2c] sm:$0xf]
  %v48 = vld [vmem:[%s1 + $0x30] sm:$0xf]
  %v49 = vld [vmem:[%s1 + $0x34] sm:$0xf]
  %v50 = vld [vmem:[%s1 + $0x38] sm:$0xf]
  %v51 = vld [vmem:[%s1 + $0x3c] sm:$0xf]
  %v68 = vunpack.c.l.b16 %v36
  %v69 = vunpack.c.l.b16 %v37
  %v70 = vunpack.c.l.b16 %v38
  %v71 = vunpack.c.l.b16 %v39
  %v72 = vunpack.c.l.b16 %v40
  %v73 = vunpack.c.l.b16 %v41
  %v74 = vunpack.c.l.b16 %v42
  %v75 = vunpack.c.l.b16 %v43
  %v76 = vunpack.c.l.b16 %v44
  %v77 = vunpack.c.l.b16 %v45
  %v78 = vunpack.c.l.b16 %v46
  %v79 = vunpack.c.l.b16 %v47
  %v80 = vunpack.c.l.b16 %v48
  %v81 = vunpack.c.l.b16 %v49
  %v82 = vunpack.c.l.b16 %v50
  %v83 = vunpack.c.l.b16 %v51
  %v84 = vpack.c.b16 %v69, %v68
  %v85 = vpack.c.b16 %v71, %v70
  %v86 = vpack.c.b16 %v73, %v72
  %v87 = vpack.c.b16 %v75, %v74
  %v88 = vpack.c.b16 %v77, %v76
  %v89 = vpack.c.b16 %v79, %v78
  %v90 = vpack.c.b16 %v81, %v80
  %v91 = vpack.c.b16 %v83, %v82
  %100 = vmatprep.subr.bf16.mxu0 0
  %101 = vmatpush1.bf16.msra.mxu0 %v84
  %102 = vmatprep.subr.bf16.mxu0 0
  %103 = vmatpush1.bf16.msra.mxu0 %v85
  %104 = vmatprep.subr.bf16.mxu0 0
  %105 = vmatpush1.bf16.msra.mxu0 %v86
  %106 = vmatprep.subr.bf16.mxu0 0
  %107 = vmatpush1.bf16.msra.mxu0 %v87
  %108 = vmatprep.subr.bf16.mxu0 0
  %109 = vmatpush1.bf16.msra.mxu0 %v88
  %110 = vmatprep.subr.bf16.mxu0 0
  %111 = vmatpush1.bf16.msra.mxu0 %v89
  %112 = vmatprep.subr.bf16.mxu0 0
  %113 = vmatpush1.bf16.msra.mxu0 %v90
  %114 = vmatprep.subr.bf16.mxu0 0
  %115 = vmatpush1.bf16.msra.mxu0 %v91
  %116 = vmatprep.subr.bf16.mxu0 0
  %117 = vmatpush1.bf16.msra.mxu0 0
  %118 = vmatprep.subr.bf16.mxu0 0
  %119 = vmatpush1.bf16.msra.mxu0 0
  %120 = vmatprep.subr.bf16.mxu0 0
  %121 = vmatpush1.bf16.msra.mxu0 0
  %122 = vmatprep.subr.bf16.mxu0 0
  %123 = vmatpush1.bf16.msra.mxu0 0
  %124 = vmatprep.subr.bf16.mxu0 0
  %125 = vmatpush1.bf16.msra.mxu0 0
  %126 = vmatprep.subr.bf16.mxu0 0
  %127 = vmatpush1.bf16.msra.mxu0 0
  %128 = vmatprep.subr.bf16.mxu0 0
  %129 = vmatpush1.bf16.msra.mxu0 0
  %130 = vmatprep.subr.bf16.mxu0 0
  %131 = vmatpush1.bf16.msra.mxu0 0
  %132 = vmatprep.mubr.bf16.mxu0 0
  %133 = vmatmul.mubr.bf16.gmra.mrb[0].mxu0 %v28
  %v134 = vpop.f32.mrb[0].mxu0
  %v135 = vadd.f32 0.0, %v134
  %v136 = vpop.f32.mrb[0].mxu0
  %v137 = vpop.f32.mrb[0].mxu0
  %v138 = vadd.f32 0.0, %v137
  %v139 = vpop.f32.mrb[0].mxu0
  %140 = vmatprep.mubr.bf16.mxu0 0
  %141 = vmatmul.mubr.bf16.gmra.mrb[0].mxu0 %v29
  %v142 = vpop.f32.mrb[0].mxu0
  %v143 = vadd.f32 0.0, %v142
  %v144 = vpop.f32.mrb[0].mxu0
  %v145 = vpop.f32.mrb[0].mxu0
  %v146 = vadd.f32 0.0, %v145
  %v147 = vpop.f32.mrb[0].mxu0
  %148 = vmatprep.mubr.bf16.mxu0 0
  %149 = vmatmul.mubr.bf16.gmra.mrb[0].mxu0 %v30
  %v150 = vpop.f32.mrb[0].mxu0
  %v151 = vadd.f32 0.0, %v150
  %v152 = vpop.f32.mrb[0].mxu0
  %v153 = vpop.f32.mrb[0].mxu0
  %v154 = vadd.f32 0.0, %v153
  %v155 = vpop.f32.mrb[0].mxu0
  %156 = vmatprep.mubr.bf16.mxu0 0
  %157 = vmatmul.mubr.bf16.gmra.mrb[0].mxu0 %v31
  %v158 = vpop.f32.mrb[0].mxu0
  %v159 = vadd.f32 0.0, %v158
  %v160 = vpop.f32.mrb[0].mxu0
  %v161 = vpop.f32.mrb[0].mxu0
  %v162 = vadd.f32 0.0, %v161
  %v163 = vpop.f32.mrb[0].mxu0
  %164 = vmatprep.mubr.bf16.mxu0 0
  %165 = vmatmul.mubr.bf16.gmra.mrb[0].mxu0 %v32
  %v166 = vpop.f32.mrb[0].mxu0
  %v167 = vadd.f32 0.0, %v166
  %v168 = vpop.f32.mrb[0].mxu0
  %v169 = vpop.f32.mrb[0].mxu0
  %v170 = vadd.f32 0.0, %v169
  %v171 = vpop.f32.mrb[0].mxu0
  %172 = vmatprep.mubr.bf16.mxu0 0
  %173 = vmatmul.mubr.bf16.gmra.mrb[0].mxu0 %v33
  %v174 = vpop.f32.mrb[0].mxu0
  %v175 = vadd.f32 0.0, %v174
  %v176 = vpop.f32.mrb[0].mxu0
  %v177 = vpop.f32.mrb[0].mxu0
  %v178 = vadd.f32 0.0, %v177
  %v179 = vpop.f32.mrb[0].mxu0
  %180 = vmatprep.mubr.bf16.mxu0 0
  %181 = vmatmul.mubr.bf16.gmra.mrb[0].mxu0 %v34
  %v182 = vpop.f32.mrb[0].mxu0
  %v183 = vadd.f32 0.0, %v182
  %v184 = vpop.f32.mrb[0].mxu0
  %v185 = vpop.f32.mrb[0].mxu0
  %v186 = vadd.f32 0.0, %v185
  %v187 = vpop.f32.mrb[0].mxu0
  %188 = vmatprep.mubr.bf16.mxu0 0
  %189 = vmatmul.mubr.bf16.gmra.mrb[0].mxu0 %v35
  %v190 = vpop.f32.mrb[0].mxu0
  %v191 = vadd.f32 0.0, %v190
  %v192 = vpop.f32.mrb[0].mxu0
  %v193 = vpop.f32.mrb[0].mxu0
  %v194 = vadd.f32 0.0, %v193
  %v195 = vpop.f32.mrb[0].mxu0
  %196 = vdwg.mxu0
  %197 = vst [vmem:[%s2] sm:$0xff] %v135
  %198 = vst [vmem:[%s2 + $0x8] sm:$0xff] %v138
  %199 = vst [vmem:[%s2 + $0x10] sm:$0xff] %v143
  %200 = vst [vmem:[%s2 + $0x18] sm:$0xff] %v146
  %201 = vst [vmem:[%s2 + $0x20] sm:$0xff] %v151
  %202 = vst [vmem:[%s2 + $0x28] sm:$0xff] %v154
  %203 = vst [vmem:[%s2 + $0x30] sm:$0xff] %v159
  %204 = vst [vmem:[%s2 + $0x38] sm:$0xff] %v162
  %205 = vst [vmem:[%s2 + $0x40] sm:$0xff] %v167
  %206 = vst [vmem:[%s2 + $0x48] sm:$0xff] %v170
  %207 = vst [vmem:[%s2 + $0x50] sm:$0xff] %v175
  %208 = vst [vmem:[%s2 + $0x58] sm:$0xff] %v178
  %209 = vst [vmem:[%s2 + $0x60] sm:$0xff] %v183
  %210 = vst [vmem:[%s2 + $0x68] sm:$0xff] %v186
  %211 = vst [vmem:[%s2 + $0x70] sm:$0xff] %v191
  %212 = vst [vmem:[%s2 + $0x78] sm:$0xff] %v194
  // Predicated region
  $region10: #{_lambda_.21} parent=0 // pred_check
    _
  $region11: #{_lambda_.21} parent=0 // pred_check_branch
    %214 = sbr.rel (0) target = $region13
  $region12: #{_lambda_.21} parent=0 // pred_region
    _
  $region13: #{_lambda_.21} parent=0 // pred_fallthru
    _
  // Predicated region
  $region14: #{_lambda_.21} parent=0 // pred_check
    _
  $region15: #{_lambda_.21} parent=0 // pred_check_branch
    %216 = sbr.rel (0) target = $region17
  $region16: #{_lambda_.21} parent=0 // pred_region
    _
  $region17: #{_lambda_.21} parent=0 // pred_fallthru
    _

</llo_original>
